<compile_context>
chip_gen: v6e
topology: v6e:2x2x1
jax: 0.10.0
libtpu: 0.0.40
codegen_flags: <defaults>
</compile_context>

<pallas_src>
import jax
import jax.numpy as jnp
from jax.experimental import pallas as pl
from jax.experimental.pallas import tpu as pltpu

# Fixed architecture sizes (input must be 7x7 so encode() ends at 4*4*8 = 128).
B_DEF = 2
C_IN, H_IN, W_IN = 3, 7, 7
D_IN = C_IN * H_IN * W_IN          # 147  flattened input (CHW order)
D_H1 = 16 * 6 * 6                  # 576  conv1 output, CHW-flattened
D_H2 = 8 * 4 * 4                   # 128  conv2 output == Linear(128, .) input
D_LAT = 2                          # latent dim
D_H4 = 16 * 7 * 7                  # 784  convtrans1 output
D_OUT = 3 * 7 * 7                  # 147  reconstruction (CHW order)

# Padded (tile-clean) sizes.
D_IN_PAD = 160                     # 147 -> 160 (bf16 sublane pack = 16)
D_H1_PAD = 640                     # 576 -> 640 (multiple of 128)
D_ML_PAD = 128                     # [mean|log_var] padded to full lane width
D_H4_PAD = 896                     # 784 -> 896
D_OUT_PAD = 256                    # 147 -> 256
M_SUB = 8                          # sublane count (row padding granularity)


# ---------------------------------------------------------------------------
# Fused Pallas kernel: conv1 -> conv2 -> [efc1|efc2] -> sample -> dfc1 ->
# convtrans1 -> convtrans2, all operands VMEM-resident / prepacked.
# ---------------------------------------------------------------------------
def _vae_fused_kernel(x_ref, eps_ref,
                      m1_ref, b1_ref, m2_ref, b2_ref,
                      mefc_ref, befc_ref, mdfc_ref, bdfc_ref,
                      mct1_ref, bct1_ref, mct2_ref, bct2_ref,
                      ml_ref, recon_ref):
    def mm_bf16(act_f32, m_ref, b_ref):
        # bf16 operands, f32 accumulation on the MXU; bias add in f32.
        return jnp.dot(act_f32.astype(jnp.bfloat16), m_ref[...],
                       preferred_element_type=jnp.float32) + b_ref[...]

    x = x_ref[...]                                           # (8, 160) f32
    h = jnp.maximum(mm_bf16(x, m1_ref, b1_ref), 0.0)         # conv1 + ReLU   (8, 640)
    h = jnp.maximum(mm_bf16(h, m2_ref, b2_ref), 0.0)         # conv2 + ReLU   (8, 128)

    # Merged encoder FCs in f32 (N tiny -> MXU weight push dominates anyway;
    # f32 keeps mean/log_var accurate).  Lanes 0..1 = mean, 2..3 = log_var.
    ml = jnp.dot(h, mefc_ref[...],
                 preferred_element_type=jnp.float32) + befc_ref[...]   # (8, 128)
    mean = ml[:, 0:D_LAT]
    log_var = ml[:, D_LAT:2 * D_LAT]

    # Reparameterization (f32 elementwise; exp runs on the EUP).
    z = mean + eps_ref[...] * jnp.exp(0.5 * log_var)          # (8, 2) f32

    # decoderfc1 (K=2) off the MXU: two f32 VPU broadcast-FMAs, no bf16 cast.
    h = z[:, 0:1] * mdfc_ref[0:1, :] + z[:, 1:2] * mdfc_ref[1:2, :] + bdfc_ref[...]
    h = jnp.maximum(h, 0.0)                                   # (8, 128)

    h = jnp.maximum(mm_bf16(h, mct1_ref, bct1_ref), 0.0)      # convtrans1 + ReLU (8, 896)
    recon = mm_bf16(h, mct2_ref, bct2_ref)                    # convtrans2        (8, 256)

    ml_ref[...] = ml                                          # lane-dense store
    recon_ref[...] = recon                                    # lane-dense store


def vae_forward(packed, x_nchw, eps):
    B = x_nchw.shape[0]
    m_pad = ((B + M_SUB - 1) // M_SUB) * M_SUB                # sublane-dense rows
    x_flat = x_nchw.reshape(B, D_IN)                          # CHW flatten == PyTorch order
    xp = jnp.zeros((m_pad, D_IN_PAD), jnp.float32).at[:B, :D_IN].set(x_flat)
    ep = jnp.zeros((m_pad, D_LAT), jnp.float32).at[:B, :].set(eps)

    vmem = pl.BlockSpec(memory_space=pltpu.MemorySpace.VMEM)
    ml, recon = pl.pallas_call(
        _vae_fused_kernel,
        out_shape=(jax.ShapeDtypeStruct((m_pad, D_ML_PAD), jnp.float32),
                   jax.ShapeDtypeStruct((m_pad, D_OUT_PAD), jnp.float32)),
        in_specs=[vmem] * 14,
        out_specs=(vmem, vmem),
    )(xp, ep,
      packed["m1"], packed["b1"], packed["m2"], packed["b2"],
      packed["mefc"], packed["befc"], packed["mdfc"], packed["bdfc"],
      packed["mct1"], packed["bct1"], packed["mct2"], packed["bct2"])

    mean = ml[:B, 0:D_LAT]
    log_var = ml[:B, D_LAT:2 * D_LAT]
    recon3 = recon[:B, :D_OUT].reshape(B, 3, H_IN, W_IN)      # NCHW
    return mean, log_var, recon3


# ---------------------------------------------------------------------------
# One-time prepacking (init-time, outside the hot path)
# ---------------------------------------------------------------------------
def _conv_nchw(x, w_oihw, pad=None, lhs_dilation=None):
    return jax.lax.conv_general_dilated(
        x, w_oihw, window_strides=(1, 1),
        padding='VALID' if pad is None else [(pad, pad), (pad, pad)],
        lhs_dilation=lhs_dilation,
        dimension_numbers=('NCHW', 'OIHW', 'NCHW'))


def _convtranspose_as_conv(w_iohw, stride, padding):
    """PyTorch ConvTranspose2d == input-dilated conv with flipped/transposed weight."""
    k = w_iohw.shape[2]
    w_oihw = jnp.flip(w_iohw, axis=(2, 3)).transpose(1, 0, 2, 3)
    return w_oihw, k - 1 - padding, stride


def _dense_operator(apply_fn, in_shape):
    """Dense matrix M with apply_fn(x)[b].ravel() == x[b].ravel() @ M (CHW order)."""
    n = 1
    for d in in_shape:
        n *= d
    basis = jnp.eye(n, dtype=jnp.float32).reshape((n,) + tuple(in_shape))
    return apply_fn(basis).reshape(n, -1)


def prepack(params):
    """Fold every conv / transposed conv into a dense CHW->CHW operator matrix
    (bf16, zero-padded to tile-clean shapes) + per-position bias row (f32,
    padded with exact zeros); merge the two encoder FCs (kept f32); keep the
    tiny decoderfc1 as f32 rows for the in-kernel VPU FMA."""
    bf16, f32 = jnp.bfloat16, jnp.float32

    def conv_apply(w):
        return lambda xb: _conv_nchw(xb, w)

    def convt_apply(w_iohw, stride, padding):
        w_oihw, p, s = _convtranspose_as_conv(w_iohw, stride, padding)
        return lambda xb: _conv_nchw(xb, w_oihw, pad=p, lhs_dilation=(s, s))

    def padm(m, rows, cols, dtype):
        return jnp.pad(m, ((0, rows - m.shape[0]), (0, cols - m.shape[1]))).astype(dtype)

    def padb(v, cols):
        v = v.reshape(1, -1).astype(f32)
        return jnp.pad(v, ((0, 0), (0, cols - v.shape[1])))

    # Unpadded dense operators (CHW order, matches PyTorch .view()).
    m1 = _dense_operator(conv_apply(params["conv1_w"]), (3, 7, 7))        # (147, 576)
    b1 = jnp.repeat(params["conv1_b"], 6 * 6)                             # (576,)
    m2 = _dense_operator(conv_apply(params["conv2_w"]), (16, 6, 6))       # (576, 128)
    b2 = jnp.repeat(params["conv2_b"], 4 * 4)                             # (128,)
    mefc = jnp.concatenate([params["efc1_w"].T, params["efc2_w"].T], 1)   # (128, 4)
    befc = jnp.concatenate([params["efc1_b"], params["efc2_b"]])          # (4,)
    mct1 = _dense_operator(convt_apply(params["ct1_w"], 2, 1), (8, 4, 4)) # (128, 784)
    bct1 = jnp.repeat(params["ct1_b"], 7 * 7)                             # (784,)
    mct2 = _dense_operator(convt_apply(params["ct2_w"], 1, 1), (16, 7, 7))# (784, 147)
    bct2 = jnp.repeat(params["ct2_b"], 7 * 7)                             # (147,)

    return {
        "m1":   padm(m1, D_IN_PAD, D_H1_PAD, bf16),
        "b1":   padb(b1, D_H1_PAD),
        "m2":   padm(m2, D_H1_PAD, D_H2, bf16),
        "b2":   padb(b2, D_H2),
        "mefc": padm(mefc, D_H2, D_ML_PAD, f32),    # f32: accuracy for mean/log_var
        "befc": padb(befc, D_ML_PAD),
        "mdfc": params["dfc1_w"].T.astype(f32),     # (2, 128) f32: VPU FMA in-kernel
        "bdfc": params["dfc1_b"].reshape(1, -1).astype(f32),
        "mct1": padm(mct1, D_H2, D_H4_PAD, bf16),
        "bct1": padb(bct1, D_H4_PAD),
        "mct2": padm(mct2, D_H4_PAD, D_OUT_PAD, bf16),
        "bct2": padb(bct2, D_OUT_PAD),
    }


# ---------------------------------------------------------------------------
# Synthetic parameters in PyTorch layouts (Conv2d OIHW, ConvTranspose2d IOHW,
# Linear (out, in)), PyTorch-style uniform init.
# ---------------------------------------------------------------------------
def init_params(key):
    ks = jax.random.split(key, 14)

    def u(k, shape, fan_in):
        bound = 1.0 / jnp.sqrt(jnp.float32(fan_in))
        return jax.random.uniform(k, shape, jnp.float32, -bound, bound)

    return {
        "conv1_w": u(ks[0], (16, 3, 2, 2), 3 * 2 * 2),     # nn.Conv2d(3, 16, 2)
        "conv1_b": u(ks[1], (16,), 3 * 2 * 2),
        "conv2_w": u(ks[2], (8, 16, 3, 3), 16 * 3 * 3),    # nn.Conv2d(16, 8, 3)
        "conv2_b": u(ks[3], (8,), 16 * 3 * 3),
        "efc1_w": u(ks[4], (2, 128), 128),                 # nn.Linear(128, 2)
        "efc1_b": u(ks[5], (2,), 128),
        "efc2_w": u(ks[6], (2, 128), 128),                 # nn.Linear(128, 2)
        "efc2_b": u(ks[7], (2,), 128),
        "dfc1_w": u(ks[8], (128, 2), 2),                   # nn.Linear(2, 128)
        "dfc1_b": u(ks[9], (128,), 2),
        "ct1_w": u(ks[10], (8, 16, 3, 3), 16 * 3 * 3),     # ConvTranspose2d(8,16,3,s=2,p=1)
        "ct1_b": u(ks[11], (16,), 16 * 3 * 3),
        "ct2_w": u(ks[12], (16, 3, 3, 3), 3 * 3 * 3),      # ConvTranspose2d(16,3,3,p=1)
        "ct2_b": u(ks[13], (3,), 3 * 3 * 3),
    }


# ---------------------------------------------------------------------------
# Pure-JAX f32 reference with the exact PyTorch module semantics (for checking)
# ---------------------------------------------------------------------------
def vae_reference(params, x, eps):
    B = x.shape[0]
    bc = lambda b: b[None, :, None, None]
    h = jax.nn.relu(_conv_nchw(x, params["conv1_w"]) + bc(params["conv1_b"]))
    h = jax.nn.relu(_conv_nchw(h, params["conv2_w"]) + bc(params["conv2_b"]))
    hf = h.reshape(B, 128)
    mean = hf @ params["efc1_w"].T + params["efc1_b"]
    log_var = hf @ params["efc2_w"].T + params["efc2_b"]
    z = mean + eps * jnp.exp(0.5 * log_var)
    hd = jax.nn.relu(z @ params["dfc1_w"].T + params["dfc1_b"]).reshape(B, 8, 4, 4)
    w1, p1, s1 = _convtranspose_as_conv(params["ct1_w"], 2, 1)
    hd = jax.nn.relu(_conv_nchw(hd, w1, pad=p1, lhs_dilation=(s1, s1)) + bc(params["ct1_b"]))
    w2, p2, s2 = _convtranspose_as_conv(params["ct2_w"], 1, 1)
    recon = _conv_nchw(hd, w2, pad=p2, lhs_dilation=(s2, s2)) + bc(params["ct2_b"])
    return mean, log_var, recon


if __name__ == "__main__":
    key = jax.random.PRNGKey(0)
    kp, kx, ke = jax.random.split(key, 3)

    params = init_params(kp)
    packed = prepack(params)          # one-time weight folding / padding

    # 7x7 input so encode() ends at 4*4*8 = 128 features, as Linear(4*4*8, 2) requires.
    x = jax.random.normal(kx, (B_DEF, C_IN, H_IN, W_IN), jnp.float32)
    # TODO(synk): torch.randn_like inside sampling() is replaced by a deterministic
    # eps passed from outside (pltpu.prng_seed/prng_random_bits could generate it in-kernel).
    eps = jax.random.normal(ke, (B_DEF, D_LAT), jnp.float32)

    mean, log_var, recon = jax.jit(vae_forward)(packed, x, eps)
    jax.block_until_ready((mean, log_var, recon))

    assert mean.shape == (B_DEF, D_LAT)
    assert log_var.shape == (B_DEF, D_LAT)
    assert recon.shape == (B_DEF, 3, H_IN, W_IN)

    # Numerical check vs. the f32 reference (conv operators are bf16 -> loose tol;
    # the two tiny FC matmuls and all elementwise math are f32).
    mean_r, lv_r, recon_r = vae_reference(params, x, eps)
    assert float(jnp.max(jnp.abs(mean - mean_r))) < 5e-2
    assert float(jnp.max(jnp.abs(log_var - lv_r))) < 5e-2
    assert float(jnp.max(jnp.abs(recon - recon_r))) < 1.5e-1

    print("KERNEL_OK")
</pallas_src>

<mosaic_0001>
module attributes {stable_mosaic.version = 11 : i64} {
  func.func @_vae_fused_kernel(%arg0: memref<8x160xf32, #tpu.memory_space<vmem>>, %arg1: memref<8x2xf32, #tpu.memory_space<vmem>>, %arg2: memref<160x640xbf16, #tpu.memory_space<vmem>>, %arg3: memref<1x640xf32, #tpu.memory_space<vmem>>, %arg4: memref<640x128xbf16, #tpu.memory_space<vmem>>, %arg5: memref<1x128xf32, #tpu.memory_space<vmem>>, %arg6: memref<128x128xf32, #tpu.memory_space<vmem>>, %arg7: memref<1x128xf32, #tpu.memory_space<vmem>>, %arg8: memref<2x128xf32, #tpu.memory_space<vmem>>, %arg9: memref<1x128xf32, #tpu.memory_space<vmem>>, %arg10: memref<128x896xbf16, #tpu.memory_space<vmem>>, %arg11: memref<1x896xf32, #tpu.memory_space<vmem>>, %arg12: memref<896x256xbf16, #tpu.memory_space<vmem>>, %arg13: memref<1x256xf32, #tpu.memory_space<vmem>>, %arg14: memref<8x128xf32, #tpu.memory_space<vmem>>, %arg15: memref<8x256xf32, #tpu.memory_space<vmem>>) attributes {dimension_semantics = [], scalar_prefetch = 0 : i64, scratch_operands = 0 : i64, tpu.core_type = #tpu.core_type<tc>} {
    %c0 = arith.constant 0 : index
    %c0_0 = arith.constant 0 : index
    %0 = vector.load %arg0[%c0, %c0_0] : memref<8x160xf32, #tpu.memory_space<vmem>>, vector<8x160xf32>
    %1 = arith.truncf %0 : vector<8x160xf32> to vector<8x160xbf16>
    %c0_1 = arith.constant 0 : index
    %c0_2 = arith.constant 0 : index
    %2 = vector.load %arg2[%c0_1, %c0_2] : memref<160x640xbf16, #tpu.memory_space<vmem>>, vector<160x640xbf16>
    %cst = arith.constant dense<0.000000e+00> : vector<8x640xf32>
    %3 = tpu.matmul %1, %2, %cst {dimension_numbers = #tpu.dot_dimension_numbers<[1], [0], [0], [1], [0, 0, 1, 1], [], []>} : vector<8x160xbf16>, vector<160x640xbf16>, vector<8x640xf32> -> vector<8x640xf32>
    %c0_3 = arith.constant 0 : index
    %c0_4 = arith.constant 0 : index
    %4 = vector.load %arg3[%c0_3, %c0_4] : memref<1x640xf32, #tpu.memory_space<vmem>>, vector<1x640xf32>
    %5 = vector.broadcast %4 : vector<1x640xf32> to vector<8x640xf32>
    %6 = arith.addf %3, %5 : vector<8x640xf32>
    %cst_5 = arith.constant 0.000000e+00 : f32
    %7 = vector.broadcast %cst_5 : f32 to vector<8x640xf32>
    %8 = arith.maximumf %6, %7 : vector<8x640xf32>
    %9 = arith.truncf %8 : vector<8x640xf32> to vector<8x640xbf16>
    %c0_6 = arith.constant 0 : index
    %c0_7 = arith.constant 0 : index
    %10 = vector.load %arg4[%c0_6, %c0_7] : memref<640x128xbf16, #tpu.memory_space<vmem>>, vector<640x128xbf16>
    %cst_8 = arith.constant dense<0.000000e+00> : vector<8x128xf32>
    %11 = tpu.matmul %9, %10, %cst_8 {dimension_numbers = #tpu.dot_dimension_numbers<[1], [0], [0], [1], [0, 0, 1, 1], [], []>} : vector<8x640xbf16>, vector<640x128xbf16>, vector<8x128xf32> -> vector<8x128xf32>
    %c0_9 = arith.constant 0 : index
    %c0_10 = arith.constant 0 : index
    %12 = vector.load %arg5[%c0_9, %c0_10] : memref<1x128xf32, #tpu.memory_space<vmem>>, vector<1x128xf32>
    %13 = vector.broadcast %12 : vector<1x128xf32> to vector<8x128xf32>
    %14 = arith.addf %11, %13 : vector<8x128xf32>
    %cst_11 = arith.constant 0.000000e+00 : f32
    %15 = vector.broadcast %cst_11 : f32 to vector<8x128xf32>
    %16 = arith.maximumf %14, %15 : vector<8x128xf32>
    %c0_12 = arith.constant 0 : index
    %c0_13 = arith.constant 0 : index
    %17 = vector.load %arg6[%c0_12, %c0_13] : memref<128x128xf32, #tpu.memory_space<vmem>>, vector<128x128xf32>
    %cst_14 = arith.constant dense<0.000000e+00> : vector<8x128xf32>
    %18 = tpu.matmul %16, %17, %cst_14 {dimension_numbers = #tpu.dot_dimension_numbers<[1], [0], [0], [1], [0, 0, 1, 1], [], []>} : vector<8x128xf32>, vector<128x128xf32>, vector<8x128xf32> -> vector<8x128xf32>
    %c0_15 = arith.constant 0 : index
    %c0_16 = arith.constant 0 : index
    %19 = vector.load %arg7[%c0_15, %c0_16] : memref<1x128xf32, #tpu.memory_space<vmem>>, vector<1x128xf32>
    %20 = vector.broadcast %19 : vector<1x128xf32> to vector<8x128xf32>
    %21 = arith.addf %18, %20 : vector<8x128xf32>
    %22 = vector.extract_strided_slice %21 {offsets = [0, 0], sizes = [8, 2], strides = [1, 1]} : vector<8x128xf32> to vector<8x2xf32>
    %23 = vector.extract_strided_slice %21 {offsets = [0, 2], sizes = [8, 2], strides = [1, 1]} : vector<8x128xf32> to vector<8x2xf32>
    %c0_17 = arith.constant 0 : index
    %c0_18 = arith.constant 0 : index
    %24 = vector.load %arg1[%c0_17, %c0_18] : memref<8x2xf32, #tpu.memory_space<vmem>>, vector<8x2xf32>
    %cst_19 = arith.constant 5.000000e-01 : f32
    %25 = vector.broadcast %cst_19 : f32 to vector<8x2xf32>
    %26 = arith.mulf %25, %23 : vector<8x2xf32>
    %27 = math.exp %26 : vector<8x2xf32>
    %28 = arith.mulf %24, %27 : vector<8x2xf32>
    %29 = arith.addf %22, %28 : vector<8x2xf32>
    %30 = vector.extract_strided_slice %29 {offsets = [0, 0], sizes = [8, 1], strides = [1, 1]} : vector<8x2xf32> to vector<8x1xf32>
    %c0_20 = arith.constant 0 : index
    %c0_21 = arith.constant 0 : index
    %31 = vector.load %arg8[%c0_20, %c0_21] : memref<2x128xf32, #tpu.memory_space<vmem>>, vector<1x128xf32>
    %32 = vector.broadcast %30 : vector<8x1xf32> to vector<8x128xf32>
    %33 = vector.broadcast %31 : vector<1x128xf32> to vector<8x128xf32>
    %34 = arith.mulf %32, %33 : vector<8x128xf32>
    %35 = vector.extract_strided_slice %29 {offsets = [0, 1], sizes = [8, 1], strides = [1, 1]} : vector<8x2xf32> to vector<8x1xf32>
    %c1 = arith.constant 1 : index
    %c0_22 = arith.constant 0 : index
    %36 = vector.load %arg8[%c1, %c0_22] : memref<2x128xf32, #tpu.memory_space<vmem>>, vector<1x128xf32>
    %37 = vector.broadcast %35 : vector<8x1xf32> to vector<8x128xf32>
    %38 = vector.broadcast %36 : vector<1x128xf32> to vector<8x128xf32>
    %39 = arith.mulf %37, %38 : vector<8x128xf32>
    %40 = arith.addf %34, %39 : vector<8x128xf32>
    %c0_23 = arith.constant 0 : index
    %c0_24 = arith.constant 0 : index
    %41 = vector.load %arg9[%c0_23, %c0_24] : memref<1x128xf32, #tpu.memory_space<vmem>>, vector<1x128xf32>
    %42 = vector.broadcast %41 : vector<1x128xf32> to vector<8x128xf32>
    %43 = arith.addf %40, %42 : vector<8x128xf32>
    %cst_25 = arith.constant 0.000000e+00 : f32
    %44 = vector.broadcast %cst_25 : f32 to vector<8x128xf32>
    %45 = arith.maximumf %43, %44 : vector<8x128xf32>
    %46 = arith.truncf %45 : vector<8x128xf32> to vector<8x128xbf16>
    %c0_26 = arith.constant 0 : index
    %c0_27 = arith.constant 0 : index
    %47 = vector.load %arg10[%c0_26, %c0_27] : memref<128x896xbf16, #tpu.memory_space<vmem>>, vector<128x896xbf16>
    %cst_28 = arith.constant dense<0.000000e+00> : vector<8x896xf32>
    %48 = tpu.matmul %46, %47, %cst_28 {dimension_numbers = #tpu.dot_dimension_numbers<[1], [0], [0], [1], [0, 0, 1, 1], [], []>} : vector<8x128xbf16>, vector<128x896xbf16>, vector<8x896xf32> -> vector<8x896xf32>
    %c0_29 = arith.constant 0 : index
    %c0_30 = arith.constant 0 : index
    %49 = vector.load %arg11[%c0_29, %c0_30] : memref<1x896xf32, #tpu.memory_space<vmem>>, vector<1x896xf32>
    %50 = vector.broadcast %49 : vector<1x896xf32> to vector<8x896xf32>
    %51 = arith.addf %48, %50 : vector<8x896xf32>
    %cst_31 = arith.constant 0.000000e+00 : f32
    %52 = vector.broadcast %cst_31 : f32 to vector<8x896xf32>
    %53 = arith.maximumf %51, %52 : vector<8x896xf32>
    %54 = arith.truncf %53 : vector<8x896xf32> to vector<8x896xbf16>
    %c0_32 = arith.constant 0 : index
    %c0_33 = arith.constant 0 : index
    %55 = vector.load %arg12[%c0_32, %c0_33] : memref<896x256xbf16, #tpu.memory_space<vmem>>, vector<896x256xbf16>
    %cst_34 = arith.constant dense<0.000000e+00> : vector<8x256xf32>
    %56 = tpu.matmul %54, %55, %cst_34 {dimension_numbers = #tpu.dot_dimension_numbers<[1], [0], [0], [1], [0, 0, 1, 1], [], []>} : vector<8x896xbf16>, vector<896x256xbf16>, vector<8x256xf32> -> vector<8x256xf32>
    %c0_35 = arith.constant 0 : index
    %c0_36 = arith.constant 0 : index
    %57 = vector.load %arg13[%c0_35, %c0_36] : memref<1x256xf32, #tpu.memory_space<vmem>>, vector<1x256xf32>
    %58 = vector.broadcast %57 : vector<1x256xf32> to vector<8x256xf32>
    %59 = arith.addf %56, %58 : vector<8x256xf32>
    %c0_37 = arith.constant 0 : index
    %c0_38 = arith.constant 0 : index
    %60 = vector.load %arg14[%c0_37, %c0_38] : memref<8x128xf32, #tpu.memory_space<vmem>>, vector<8x128xf32>
    tpu.vector_store %arg14[%c0_37, %c0_38], %21 {strides = array<i32>} : memref<8x128xf32, #tpu.memory_space<vmem>>, vector<8x128xf32>,
    %c0_39 = arith.constant 0 : index
    %c0_40 = arith.constant 0 : index
    %61 = vector.load %arg15[%c0_39, %c0_40] : memref<8x256xf32, #tpu.memory_space<vmem>>, vector<8x256xf32>
    tpu.vector_store %arg15[%c0_39, %c0_40], %59 {strides = array<i32>} : memref<8x256xf32, #tpu.memory_space<vmem>>, vector<8x256xf32>,
    return
  }
}

</mosaic_0001>

<llo_original>
// kernel: vae_forward.1
$region0: #{vae_forward.1}
  #allocation0 [shape = 'u32[]', space=smem, size = 0x4, offset = 0x4, fixed_abs, tag = 'smem constant byte address 0x4 - core index']
  #allocation1 [shape = 'u32[144,128]{1,0:T(1,128)}', space=vmem, size = 0x12000, scoped, tag = 'internal scratch']
  %s0 = inlined_call_operand.vmem [shape: f32[8,160], index: 0, kind: input, shape index: {}]
  %s1 = inlined_call_operand.vmem [shape: f32[8,2], index: 1, kind: input, shape index: {}]
  %s2 = inlined_call_operand.hbm [shape: bf16[160,640], index: 2, kind: input, shape index: {}]
  %s3 = inlined_call_operand.vmem [shape: f32[1,640], index: 3, kind: input, shape index: {}]
  %s4 = inlined_call_operand.hbm [shape: bf16[640,128], index: 4, kind: input, shape index: {}]
  %s5 = inlined_call_operand.vmem [shape: f32[1,128], index: 5, kind: input, shape index: {}]
  %s6 = inlined_call_operand.vmem [shape: f32[128,128], index: 6, kind: input, shape index: {}]
  %s7 = inlined_call_operand.vmem [shape: f32[1,128], index: 7, kind: input, shape index: {}]
  %s8 = inlined_call_operand.vmem [shape: f32[2,128], index: 8, kind: input, shape index: {}]
  %s9 = inlined_call_operand.vmem [shape: f32[1,128], index: 9, kind: input, shape index: {}]
  %s10 = inlined_call_operand.hbm [shape: bf16[128,896], index: 10, kind: input, shape index: {}]
  %s11 = inlined_call_operand.vmem [shape: f32[1,896], index: 11, kind: input, shape index: {}]
  %s12 = inlined_call_operand.hbm [shape: bf16[896,256], index: 12, kind: input, shape index: {}]
  %s13 = inlined_call_operand.vmem [shape: f32[1,256], index: 13, kind: input, shape index: {}]
  %s14 = inlined_call_operand.vmem [shape: f32[8,128], index: 14, kind: output, shape index: {0}]
  %s15 = inlined_call_operand.vmem [shape: f32[8,256], index: 15, kind: output, shape index: {1}]
  %16 = xla_tuple %s14, %s15
  %s17 = sld [smem:[#allocation0]]
  $region90: #{vae_forward.1} parent=0
    _
  %s19 = ssub.s32 1, %s17
  %s20 = scalar_select 0, %s19, %s17
  $region1: #{vae_forward.1} parent=0
    #allocation2 [shape = 'u8[204800]{0}', space=vmem, size = 0x32000, scoped, tag = 'input window, operand 2, single buffered']
    #allocation3 [shape = 's32[1]{0}', space=sflag, size = 0x4, scoped, tag = 'scoped memory for vae_forward.1']
    #allocation4 [shape = 'u8[163840]{0}', space=vmem, size = 0x28000, scoped, tag = 'input window, operand 4, single buffered']
    #allocation5 [shape = 's32[1]{0}', space=sflag, size = 0x4, scoped, tag = 'scoped memory for vae_forward.1']
    #allocation6 [shape = 'u8[229376]{0}', space=vmem, size = 0x38000, scoped, tag = 'input window, operand 10, single buffered']
    #allocation7 [shape = 'u8[458752]{0}', space=vmem, size = 0x70000, scoped, tag = 'input window, operand 12, single buffered']
    #allocation8 [shape = 's32[1]{0}', space=sflag, size = 0x4, scoped, tag = 'scoped memory for vae_forward.1']
    %21 = vsyncpa [#allocation3], 0
    %22 = vsyncpa [#allocation5], 0
    %23 = vsyncpa [#allocation8], 0
    // Predicated region
    $region2: #{vae_forward.1} parent=1 // pred_check
      _
    $region3: #{vae_forward.1} parent=1 // pred_check_branch
      %25 = sbr.rel (0) target = $region5
    $region4: #{vae_forward.1} parent=1 // pred_region
      _
    $region5: #{vae_forward.1} parent=1 // pred_fallthru
      _
    // Predicated region
    $region6: #{vae_forward.1} parent=1 // pred_check
      _
    $region7: #{vae_forward.1} parent=1 // pred_check_branch
      %27 = sbr.rel (0) target = $region9
    $region8: #{vae_forward.1} parent=1 // pred_region
      _
    $region9: #{vae_forward.1} parent=1 // pred_fallthru
      _
    // Predicated region
    $region10: #{vae_forward.1} parent=1 // pred_check
      _
    $region11: #{vae_forward.1} parent=1 // pred_check_branch
      %29 = sbr.rel (0) target = $region13
    $region12: #{vae_forward.1} parent=1 // pred_region
      %s31 = ssub.s32 6400, 6400
      %32 = vsyncadd [#allocation3], %s31
      %s33 = sshll.u32 [#allocation2], 4
      %s34 = int_to_ptr.vmem [resolvable:$true] %s33
      %39 = dma.hbm_to_vmem [thread:$0]  %s2, 6400, %s34, [#allocation3], 320, 320, 20
    $region13: #{vae_forward.1} parent=1 // pred_fallthru
      _
    // Predicated region
    $region14: #{vae_forward.1} parent=1 // pred_check
      _
    $region15: #{vae_forward.1} parent=1 // pred_check_branch
      %41 = sbr.rel (0) target = $region17
    $region16: #{vae_forward.1} parent=1 // pred_region
      _
    $region17: #{vae_forward.1} parent=1 // pred_fallthru
      _
    // Predicated region
    $region18: #{vae_forward.1} parent=1 // pred_check
      _
    $region19: #{vae_forward.1} parent=1 // pred_check_branch
      %43 = sbr.rel (0) target = $region21
    $region20: #{vae_forward.1} parent=1 // pred_region
      %s45 = ssub.s32 5120, 5120
      %46 = vsyncadd [#allocation5], %s45
      %s47 = sshll.u32 [#allocation4], 4
      %s48 = int_to_ptr.vmem [resolvable:$true] %s47
      %53 = dma.hbm_to_vmem [thread:$0]  %s4, 5120, %s48, [#allocation5], 64, 64, 4
    $region21: #{vae_forward.1} parent=1 // pred_fallthru
      _
    // Predicated region
    $region22: #{vae_forward.1} parent=1 // pred_check
      _
    $region23: #{vae_forward.1} parent=1 // pred_check_branch
      %55 = sbr.rel (0) target = $region25
    $region24: #{vae_forward.1} parent=1 // pred_region
      _
    $region25: #{vae_forward.1} parent=1 // pred_fallthru
      _
    // Predicated region
    $region26: #{vae_forward.1} parent=1 // pred_check
      _
    $region27: #{vae_forward.1} parent=1 // pred_check_branch
      %57 = sbr.rel (0) target = $region29
    $region28: #{vae_forward.1} parent=1 // pred_region
      _
    $region29: #{vae_forward.1} parent=1 // pred_fallthru
      _
    // Predicated region
    $region30: #{vae_forward.1} parent=1 // pred_check
      _
    $region31: #{vae_forward.1} parent=1 // pred_check_branch
      %59 = sbr.rel (0) target = $region33
    $region32: #{vae_forward.1} parent=1 // pred_region
      _
    $region33: #{vae_forward.1} parent=1 // pred_fallthru
      _
    // Predicated region
    $region34: #{vae_forward.1} parent=1 // pred_check
      _
    $region35: #{vae_forward.1} parent=1 // pred_check_branch
      %61 = sbr.rel (0) target = $region37
    $region36: #{vae_forward.1} parent=1 // pred_region
      _
    $region37: #{vae_forward.1} parent=1 // pred_fallthru
      _
    // Predicated region
    $region38: #{vae_forward.1} parent=1 // pred_check
      _
    $region39: #{vae_forward.1} parent=1 // pred_check_branch
      %63 = sbr.rel (0) target = $region41
    $region40: #{vae_forward.1} parent=1 // pred_region
      _
    $region41: #{vae_forward.1} parent=1 // pred_fallthru
      _
    // Predicated region
    $region42: #{vae_forward.1} parent=1 // pred_check
      _
    $region43: #{vae_forward.1} parent=1 // pred_check_branch
      %65 = sbr.rel (0) target = $region45
    $region44: #{vae_forward.1} parent=1 // pred_region
      %s67 = ssub.s32 7168, 7168
      %68 = vsyncadd [#allocation5], %s67
      %s69 = sshll.u32 [#allocation6], 4
      %s70 = int_to_ptr.vmem [resolvable:$true] %s69
      %75 = dma.hbm_to_vmem [thread:$0]  %s10, 7168, %s70, [#allocation5], 448, 448, 28
    $region45: #{vae_forward.1} parent=1 // pred_fallthru
      _
    // Predicated region
    $region46: #{vae_forward.1} parent=1 // pred_check
      _
    $region47: #{vae_forward.1} parent=1 // pred_check_branch
      %77 = sbr.rel (0) target = $region49
    $region48: #{vae_forward.1} parent=1 // pred_region
      _
    $region49: #{vae_forward.1} parent=1 // pred_fallthru
      _
    // Predicated region
    $region50: #{vae_forward.1} parent=1 // pred_check
      _
    $region51: #{vae_forward.1} parent=1 // pred_check_branch
      %79 = sbr.rel (0) target = $region53
    $region52: #{vae_forward.1} parent=1 // pred_region
      %s81 = ssub.s32 14336, 14336
      %82 = vsyncadd [#allocation8], %s81
      %s83 = sshll.u32 [#allocation7], 4
      %s84 = int_to_ptr.vmem [resolvable:$true] %s83
      %89 = dma.hbm_to_vmem [thread:$0]  %s12, 14336, %s84, [#allocation8], 128, 128, 8
    $region53: #{vae_forward.1} parent=1 // pred_fallthru
      _
    // Predicated region
    $region54: #{vae_forward.1} parent=1 // pred_check
      _
    $region55: #{vae_forward.1} parent=1 // pred_check_branch
      %91 = sbr.rel (0) target = $region57
    $region56: #{vae_forward.1} parent=1 // pred_region
      _
    $region57: #{vae_forward.1} parent=1 // pred_fallthru
      _
    // Predicated region
    $region58: #{vae_forward.1} parent=1 // pred_check
      _
    $region59: #{vae_forward.1} parent=1 // pred_check_branch
      %93 = sbr.rel (0) target = $region61
    $region60: #{vae_forward.1} parent=1 // pred_region
      %94 = dma.done [#allocation3], 6400
    $region61: #{vae_forward.1} parent=1 // pred_fallthru
      _
    // Predicated region
    $region62: #{vae_forward.1} parent=1 // pred_check
      _
    $region63: #{vae_forward.1} parent=1 // pred_check_branch
      %96 = sbr.rel (0) target = $region65
    $region64: #{vae_forward.1} parent=1 // pred_region
      %97 = dma.done [#allocation5], 5120
    $region65: #{vae_forward.1} parent=1 // pred_fallthru
      _
    // Predicated region
    $region66: #{vae_forward.1} parent=1 // pred_check
      _
    $region67: #{vae_forward.1} parent=1 // pred_check_branch
      %99 = sbr.rel (0) target = $region69
    $region68: #{vae_forward.1} parent=1 // pred_region
      %100 = dma.done [#allocation5], 7168
    $region69: #{vae_forward.1} parent=1 // pred_fallthru
      _
    // Predicated region
    $region70: #{vae_forward.1} parent=1 // pred_check
      _
    $region71: #{vae_forward.1} parent=1 // pred_check_branch
      %102 = sbr.rel (0) target = $region73
    $region72: #{vae_forward.1} parent=1 // pred_region
      %103 = dma.done [#allocation8], 14336
    $region73: #{vae_forward.1} parent=1 // pred_fallthru
      _
    %v105 = vld [vmem:[%s0] sm:$0xff]
    %v106 = vld [vmem:[%s0 + $0x8] sm:$0xff]
    %v107 = vpack.c.bf16 %v105, %v105
    %v108 = vpack.c.bf16 %v106, %v106
    %v109 = vld [vmem:[#allocation2] sm:$0xff]
    %v110 = vld [vmem:[#allocation2 + $0x8] sm:$0xff]
    %v111 = vld [vmem:[#allocation2 + $0x10] sm:$0xf]
    %v112 = vld [vmem:[#allocation2 + $0x14] sm:$0xff]
    %v113 = vld [vmem:[#allocation2 + $0x1c] sm:$0xff]
    %v114 = vld [vmem:[#allocation2 + $0x24] sm:$0xf]
    %v115 = vld [vmem:[#allocation2 + $0x28] sm:$0xff]
    %v116 = vld [vmem:[#allocation2 + $0x30] sm:$0xff]
    %v117 = vld [vmem:[#allocation2 + $0x38] sm:$0xf]
    %v118 = vld [vmem:[#allocation2 + $0x3c] sm:$0xff]
    %v119 = vld [vmem:[#allocation2 + $0x44] sm:$0xff]
    %v120 = vld [vmem:[#allocation2 + $0x4c] sm:$0xf]
    %v121 = vld [vmem:[#allocation2 + $0x50] sm:$0xff]
    %v122 = vld [vmem:[#allocation2 + $0x58] sm:$0xff]
    %v123 = vld [vmem:[#allocation2 + $0x60] sm:$0xf]
    %v124 = vld [vmem:[#allocation2 + $0x64] sm:$0xff]
    %v125 = vld [vmem:[#allocation2 + $0x6c] sm:$0xff]
    %v126 = vld [vmem:[#allocation2 + $0x74] sm:$0xf]
    %v127 = vld [vmem:[#allocation2 + $0x78] sm:$0xff]
    %v128 = vld [vmem:[#allocation2 + $0x80] sm:$0xff]
    %v129 = vld [vmem:[#allocation2 + $0x88] sm:$0xf]
    %v130 = vld [vmem:[#allocation2 + $0x8c] sm:$0xff]
    %v131 = vld [vmem:[#allocation2 + $0x94] sm:$0xff]
    %v132 = vld [vmem:[#allocation2 + $0x9c] sm:$0xf]
    %v133 = vld [vmem:[#allocation2 + $0xa0] sm:$0xff]
    %v134 = vld [vmem:[#allocation2 + $0xa8] sm:$0xff]
    %v135 = vld [vmem:[#allocation2 + $0xb0] sm:$0xf]
    %v136 = vld [vmem:[#allocation2 + $0xb4] sm:$0xff]
    %v137 = vld [vmem:[#allocation2 + $0xbc] sm:$0xff]
    %v138 = vld [vmem:[#allocation2 + $0xc4] sm:$0xf]
    %v139 = vld [vmem:[#allocation2 + $0xc8] sm:$0xff]
    %v140 = vld [vmem:[#allocation2 + $0xd0] sm:$0xff]
    %v141 = vld [vmem:[#allocation2 + $0xd8] sm:$0xf]
    %v142 = vld [vmem:[#allocation2 + $0xdc] sm:$0xff]
    %v143 = vld [vmem:[#allocation2 + $0xe4] sm:$0xff]
    %v144 = vld [vmem:[#allocation2 + $0xec] sm:$0xf]
    %v145 = vld [vmem:[#allocation2 + $0xf0] sm:$0xff]
    %v146 = vld [vmem:[#allocation2 + $0xf8] sm:$0xff]
    %v147 = vld [vmem:[#allocation2 + $0x100] sm:$0xf]
    %v148 = vld [vmem:[#allocation2 + $0x104] sm:$0xff]
    %v149 = vld [vmem:[#allocation2 + $0x10c] sm:$0xff]
    %v150 = vld [vmem:[#allocation2 + $0x114] sm:$0xf]
    %v151 = vld [vmem:[#allocation2 + $0x118] sm:$0xff]
    %v152 = vld [vmem:[#allocation2 + $0x120] sm:$0xff]
    %v153 = vld [vmem:[#allocation2 + $0x128] sm:$0xf]
    %v154 = vld [vmem:[#allocation2 + $0x12c] sm:$0xff]
    %v155 = vld [vmem:[#allocation2 + $0x134] sm:$0xff]
    %v156 = vld [vmem:[#allocation2 + $0x13c] sm:$0xf]
    %v157 = vld [vmem:[#allocation2 + $0x140] sm:$0xff]
    %v158 = vld [vmem:[#allocation2 + $0x148] sm:$0xff]
    %v159 = vld [vmem:[#allocation2 + $0x150] sm:$0xf]
    %v160 = vld [vmem:[#allocation2 + $0x154] sm:$0xff]
    %v161 = vld [vmem:[#allocation2 + $0x15c] sm:$0xff]
    %v162 = vld [vmem:[#allocation2 + $0x164] sm:$0xf]
    %v163 = vld [vmem:[#allocation2 + $0x168] sm:$0xff]
    %v164 = vld [vmem:[#allocation2 + $0x170] sm:$0xff]
    %v165 = vld [vmem:[#allocation2 + $0x178] sm:$0xf]
    %v166 = vld [vmem:[#allocation2 + $0x17c] sm:$0xff]
    %v167 = vld [vmem:[#allocation2 + $0x184] sm:$0xff]
    %v168 = vld [vmem:[#allocation2 + $0x18c] sm:$0xf]
    %v169 = vld [vmem:[%s3] sm:$0x1f]
    %v171 = vlaneseq
    %v172 = vshrl.u32 %v171, 7
    %v173 = vsub.s32 0, %v172
    %v174 = vrot.slane %v169, %v173
    %v175 = vlaneseq
    %v176 = vshrl.u32 %v175, 7
    %v177 = vsub.s32 1, %v176
    %v178 = vrot.slane %v169, %v177
    %v179 = vlaneseq
    %v180 = vshrl.u32 %v179, 7
    %v181 = vsub.s32 2, %v180
    %v182 = vrot.slane %v169, %v181
    %v183 = vlaneseq
    %v184 = vshrl.u32 %v183, 7
    %v185 = vsub.s32 3, %v184
    %v186 = vrot.slane %v169, %v185
    %v187 = vlaneseq
    %v188 = vshrl.u32 %v187, 7
    %v189 = vsub.s32 4, %v188
    %v190 = vrot.slane %v169, %v189
    %v256 = vunpack.c.l.b16 %v109
    %v257 = vunpack.c.h.b16 %v109
    %v258 = vunpack.c.l.b16 %v110
    %v259 = vunpack.c.h.b16 %v110
    %v260 = vunpack.c.l.b16 %v111
    %v261 = vunpack.c.l.b16 %v112
    %v262 = vunpack.c.h.b16 %v112
    %v263 = vunpack.c.l.b16 %v113
    %v264 = vunpack.c.h.b16 %v113
    %v265 = vunpack.c.l.b16 %v114
    %v266 = vunpack.c.l.b16 %v115
    %v267 = vunpack.c.h.b16 %v115
    %v268 = vunpack.c.l.b16 %v116
    %v269 = vunpack.c.h.b16 %v116
    %v270 = vunpack.c.l.b16 %v117
    %v271 = vunpack.c.l.b16 %v118
    %v272 = vunpack.c.h.b16 %v118
    %v273 = vunpack.c.l.b16 %v119
    %v274 = vunpack.c.h.b16 %v119
    %v275 = vunpack.c.l.b16 %v120
    %v276 = vunpack.c.l.b16 %v121
    %v277 = vunpack.c.h.b16 %v121
    %v278 = vunpack.c.l.b16 %v122
    %v279 = vunpack.c.h.b16 %v122
    %v280 = vunpack.c.l.b16 %v123
    %v281 = vunpack.c.l.b16 %v124
    %v282 = vunpack.c.h.b16 %v124
    %v283 = vunpack.c.l.b16 %v125
    %v284 = vunpack.c.h.b16 %v125
    %v285 = vunpack.c.l.b16 %v126
    %v286 = vunpack.c.l.b16 %v127
    %v287 = vunpack.c.h.b16 %v127
    %v288 = vunpack.c.l.b16 %v128
    %v289 = vunpack.c.h.b16 %v128
    %v290 = vunpack.c.l.b16 %v129
    %v291 = vunpack.c.l.b16 %v130
    %v292 = vunpack.c.h.b16 %v130
    %v293 = vunpack.c.l.b16 %v131
    %v294 = vunpack.c.h.b16 %v131
    %v295 = vunpack.c.l.b16 %v132
    %v296 = vunpack.c.l.b16 %v133
    %v297 = vunpack.c.h.b16 %v133
    %v298 = vunpack.c.l.b16 %v134
    %v299 = vunpack.c.h.b16 %v134
    %v300 = vunpack.c.l.b16 %v135
    %v301 = vunpack.c.l.b16 %v136
    %v302 = vunpack.c.h.b16 %v136
    %v303 = vunpack.c.l.b16 %v137
    %v304 = vunpack.c.h.b16 %v137
    %v305 = vunpack.c.l.b16 %v138
    %v306 = vunpack.c.l.b16 %v139
    %v307 = vunpack.c.h.b16 %v139
    %v308 = vunpack.c.l.b16 %v140
    %v309 = vunpack.c.h.b16 %v140
    %v310 = vunpack.c.l.b16 %v141
    %v311 = vunpack.c.l.b16 %v142
    %v312 = vunpack.c.h.b16 %v142
    %v313 = vunpack.c.l.b16 %v143
    %v314 = vunpack.c.h.b16 %v143
    %v315 = vunpack.c.l.b16 %v144
    %v316 = vunpack.c.l.b16 %v145
    %v317 = vunpack.c.h.b16 %v145
    %v318 = vunpack.c.l.b16 %v146
    %v319 = vunpack.c.h.b16 %v146
    %v320 = vunpack.c.l.b16 %v147
    %v321 = vunpack.c.l.b16 %v148
    %v322 = vunpack.c.h.b16 %v148
    %v323 = vunpack.c.l.b16 %v149
    %v324 = vunpack.c.h.b16 %v149
    %v325 = vunpack.c.l.b16 %v150
    %v326 = vunpack.c.l.b16 %v151
    %v327 = vunpack.c.h.b16 %v151
    %v328 = vunpack.c.l.b16 %v152
    %v329 = vunpack.c.h.b16 %v152
    %v330 = vunpack.c.l.b16 %v153
    %v331 = vunpack.c.l.b16 %v154
    %v332 = vunpack.c.h.b16 %v154
    %v333 = vunpack.c.l.b16 %v155
    %v334 = vunpack.c.h.b16 %v155
    %v335 = vunpack.c.l.b16 %v156
    %v336 = vunpack.c.l.b16 %v157
    %v337 = vunpack.c.h.b16 %v157
    %v338 = vunpack.c.l.b16 %v158
    %v339 = vunpack.c.h.b16 %v158
    %v340 = vunpack.c.l.b16 %v159
    %v341 = vunpack.c.l.b16 %v160
    %v342 = vunpack.c.h.b16 %v160
    %v343 = vunpack.c.l.b16 %v161
    %v344 = vunpack.c.h.b16 %v161
    %v345 = vunpack.c.l.b16 %v162
    %v346 = vunpack.c.l.b16 %v163
    %v347 = vunpack.c.h.b16 %v163
    %v348 = vunpack.c.l.b16 %v164
    %v349 = vunpack.c.h.b16 %v164
    %v350 = vunpack.c.l.b16 %v165
    %v351 = vunpack.c.l.b16 %v166
    %v352 = vunpack.c.h.b16 %v166
    %v353 = vunpack.c.l.b16 %v167
    %v354 = vunpack.c.h.b16 %v167
    %v355 = vunpack.c.l.b16 %v168
    %v356 = vpack.c.b16 %v261, %v256
    %v357 = vpack.c.b16 %v262, %v257
    %v358 = vpack.c.b16 %v263, %v258
    %v359 = vpack.c.b16 %v264, %v259
    %v360 = vpack.c.b16 %v265, %v260
    %v361 = vpack.c.b16 %v271, %v266
    %v362 = vpack.c.b16 %v272, %v267
    %v363 = vpack.c.b16 %v273, %v268
    %v364 = vpack.c.b16 %v274, %v269
    %v365 = vpack.c.b16 %v275, %v270
    %v366 = vpack.c.b16 %v281, %v276
    %v367 = vpack.c.b16 %v282, %v277
    %v368 = vpack.c.b16 %v283, %v278
    %v369 = vpack.c.b16 %v284, %v279
    %v370 = vpack.c.b16 %v285, %v280
    %v371 = vpack.c.b16 %v291, %v286
    %v372 = vpack.c.b16 %v292, %v287
    %v373 = vpack.c.b16 %v293, %v288
    %v374 = vpack.c.b16 %v294, %v289
    %v375 = vpack.c.b16 %v295, %v290
    %v376 = vpack.c.b16 %v301, %v296
    %v377 = vpack.c.b16 %v302, %v297
    %v378 = vpack.c.b16 %v303, %v298
    %v379 = vpack.c.b16 %v304, %v299
    %v380 = vpack.c.b16 %v305, %v300
    %v381 = vpack.c.b16 %v311, %v306
    %v382 = vpack.c.b16 %v312, %v307
    %v383 = vpack.c.b16 %v313, %v308
    %v384 = vpack.c.b16 %v314, %v309
    %v385 = vpack.c.b16 %v315, %v310
    %v386 = vpack.c.b16 %v321, %v316
    %v387 = vpack.c.b16 %v322, %v317
    %v388 = vpack.c.b16 %v323, %v318
    %v389 = vpack.c.b16 %v324, %v319
    %v390 = vpack.c.b16 %v325, %v320
    %v391 = vpack.c.b16 %v331, %v326
    %v392 = vpack.c.b16 %v332, %v327
    %v393 = vpack.c.b16 %v333, %v328
    %v394 = vpack.c.b16 %v334, %v329
    %v395 = vpack.c.b16 %v335, %v330
    %v396 = vpack.c.b16 %v341, %v336
    %v397 = vpack.c.b16 %v342, %v337
    %v398 = vpack.c.b16 %v343, %v338
    %v399 = vpack.c.b16 %v344, %v339
    %v400 = vpack.c.b16 %v345, %v340
    %v401 = vpack.c.b16 %v351, %v346
    %v402 = vpack.c.b16 %v352, %v347
    %v403 = vpack.c.b16 %v353, %v348
    %v404 = vpack.c.b16 %v354, %v349
    %v405 = vpack.c.b16 %v355, %v350
    %vm456 = vcmask 261120
    %v458 = vsel %vm456, %v108, 0
    %460 = vmatprep.subr.bf16.mxu0 %v392
    %461 = vmatpush1.bf16.msra.mxu0 %v391
    %462 = vmatprep.subr.bf16.mxu0 %v387
    %463 = vmatpush1.bf16.msra.mxu0 %v386
    %464 = vmatprep.subr.bf16.mxu0 %v382
    %465 = vmatpush1.bf16.msra.mxu0 %v381
    %466 = vmatprep.subr.bf16.mxu0 %v377
    %467 = vmatpush1.bf16.msra.mxu0 %v376
    %468 = vmatprep.subr.bf16.mxu0 %v372
    %469 = vmatpush1.bf16.msra.mxu0 %v371
    %470 = vmatprep.subr.bf16.mxu0 %v367
    %471 = vmatpush1.bf16.msra.mxu0 %v366
    %472 = vmatprep.subr.bf16.mxu0 %v362
    %473 = vmatpush1.bf16.msra.mxu0 %v361
    %474 = vmatprep.subr.bf16.mxu0 %v357
    %475 = vmatpush1.bf16.msra.mxu0 %v356
    %476 = vmatprep.subr.bf16.mxu0 0
    %477 = vmatpush2.bf16.msra.mxu0 0
    %478 = vmatprep.subr.bf16.mxu0 0
    %479 = vmatpush2.bf16.msra.mxu0 0
    %480 = vmatprep.subr.bf16.mxu0 0
    %481 = vmatpush2.bf16.msra.mxu0 0
    %482 = vmatprep.subr.bf16.mxu0 0
    %483 = vmatpush2.bf16.msra.mxu0 0
    %484 = vmatprep.subr.bf16.mxu0 0
    %485 = vmatpush2.bf16.msra.mxu0 0
    %486 = vmatprep.subr.bf16.mxu0 0
    %487 = vmatpush2.bf16.msra.mxu0 0
    %488 = vmatprep.subr.bf16.mxu0 %v402
    %489 = vmatpush2.bf16.msra.mxu0 %v401
    %490 = vmatprep.subr.bf16.mxu0 %v397
    %491 = vmatpush2.bf16.msra.mxu0 %v396
    %492 = vmatprep.mubr.bf16.mxu0 %v458
    %493 = vmatmul.mubr.bf16.gmra.mxu0 %v107
    %v494 = vpop.f32.mrf.mxu0
    %v495 = vadd.f32 %v174, %v494
    %v496 = vpop.f32.mrf.mxu0
    %v497 = vadd.f32 %v178, %v496
    %v498 = vpop.f32.mrf.mxu0
    %v499 = vpop.f32.mrf.mxu0
    %500 = vdwg.mxu0
    %501 = vmatprep.subr.bf16.mxu0 %v394
    %502 = vmatpush1.bf16.msra.mxu0 %v393
    %503 = vmatprep.subr.bf16.mxu0 %v389
    %504 = vmatpush1.bf16.msra.mxu0 %v388
    %505 = vmatprep.subr.bf16.mxu0 %v384
    %506 = vmatpush1.bf16.msra.mxu0 %v383
    %507 = vmatprep.subr.bf16.mxu0 %v379
    %508 = vmatpush1.bf16.msra.mxu0 %v378
    %509 = vmatprep.subr.bf16.mxu0 %v374
    %510 = vmatpush1.bf16.msra.mxu0 %v373
    %511 = vmatprep.subr.bf16.mxu0 %v369
    %512 = vmatpush1.bf16.msra.mxu0 %v368
    %513 = vmatprep.subr.bf16.mxu0 %v364
    %514 = vmatpush1.bf16.msra.mxu0 %v363
    %515 = vmatprep.subr.bf16.mxu0 %v359
    %516 = vmatpush1.bf16.msra.mxu0 %v358
    %517 = vmatprep.subr.bf16.mxu0 0
    %518 = vmatpush2.bf16.msra.mxu0 0
    %519 = vmatprep.subr.bf16.mxu0 0
    %520 = vmatpush2.bf16.msra.mxu0 0
    %521 = vmatprep.subr.bf16.mxu0 0
    %522 = vmatpush2.bf16.msra.mxu0 0
    %523 = vmatprep.subr.bf16.mxu0 0
    %524 = vmatpush2.bf16.msra.mxu0 0
    %525 = vmatprep.subr.bf16.mxu0 0
    %526 = vmatpush2.bf16.msra.mxu0 0
    %527 = vmatprep.subr.bf16.mxu0 0
    %528 = vmatpush2.bf16.msra.mxu0 0
    %529 = vmatprep.subr.bf16.mxu0 %v404
    %530 = vmatpush2.bf16.msra.mxu0 %v403
    %531 = vmatprep.subr.bf16.mxu0 %v399
    %532 = vmatpush2.bf16.msra.mxu0 %v398
    %533 = vmatprep.mubr.bf16.mxu0 %v458
    %534 = vmatmul.mubr.bf16.gmra.mxu0 %v107
    %v535 = vpop.f32.mrf.mxu0
    %v536 = vadd.f32 %v182, %v535
    %v537 = vpop.f32.mrf.mxu0
    %v538 = vadd.f32 %v186, %v537
    %v539 = vpop.f32.mrf.mxu0
    %v540 = vpop.f32.mrf.mxu0
    %541 = vdwg.mxu0
    %542 = vmatprep.subr.bf16.mxu0 0
    %543 = vmatpush1.bf16.msra.mxu0 %v395
    %544 = vmatprep.subr.bf16.mxu0 0
    %545 = vmatpush1.bf16.msra.mxu0 %v390
    %546 = vmatprep.subr.bf16.mxu0 0
    %547 = vmatpush1.bf16.msra.mxu0 %v385
    %548 = vmatprep.subr.bf16.mxu0 0
    %549 = vmatpush1.bf16.msra.mxu0 %v380
    %550 = vmatprep.subr.bf16.mxu0 0
    %551 = vmatpush1.bf16.msra.mxu0 %v375
    %552 = vmatprep.subr.bf16.mxu0 0
    %553 = vmatpush1.bf16.msra.mxu0 %v370
    %554 = vmatprep.subr.bf16.mxu0 0
    %555 = vmatpush1.bf16.msra.mxu0 %v365
    %556 = vmatprep.subr.bf16.mxu0 0
    %557 = vmatpush1.bf16.msra.mxu0 %v360
    %558 = vmatprep.subr.bf16.mxu0 0
    %559 = vmatpush2.bf16.msra.mxu0 0
    %560 = vmatprep.subr.bf16.mxu0 0
    %561 = vmatpush2.bf16.msra.mxu0 0
    %562 = vmatprep.subr.bf16.mxu0 0
    %563 = vmatpush2.bf16.msra.mxu0 0
    %564 = vmatprep.subr.bf16.mxu0 0
    %565 = vmatpush2.bf16.msra.mxu0 0
    %566 = vmatprep.subr.bf16.mxu0 0
    %567 = vmatpush2.bf16.msra.mxu0 0
    %568 = vmatprep.subr.bf16.mxu0 0
    %569 = vmatpush2.bf16.msra.mxu0 0
    %570 = vmatprep.subr.bf16.mxu0 0
    %571 = vmatpush2.bf16.msra.mxu0 %v405
    %572 = vmatprep.subr.bf16.mxu0 0
    %573 = vmatpush2.bf16.msra.mxu0 %v400
    %574 = vmatprep.mubr.bf16.mxu0 %v458
    %575 = vmatmul.mubr.bf16.gmra.mxu0 %v107
    %v576 = vpop.f32.mrf.mxu0
    %v577 = vadd.f32 %v190, %v576
    %v578 = vpop.f32.mrf.mxu0
    %v579 = vpop.f32.mrf.mxu0
    %v580 = vpop.f32.mrf.mxu0
    %581 = vdwg.mxu0
    %v582 = vmax.f32 %v495, 0.0
    %v583 = vmax.f32 %v497, 0.0
    %v584 = vmax.f32 %v536, 0.0
    %v585 = vmax.f32 %v538, 0.0
    %v586 = vmax.f32 %v577, 0.0
    %v587 = vpack.c.bf16 %v582, %v582
    %v588 = vpack.c.bf16 %v583, %v583
    %v589 = vpack.c.bf16 %v584, %v584
    %v590 = vpack.c.bf16 %v585, %v585
    %v591 = vpack.c.bf16 %v586, %v586
    %v592 = vld [vmem:[#allocation4] sm:$0xf]
    %v593 = vld [vmem:[#allocation4 + $0x4] sm:$0xf]
    %v594 = vld [vmem:[#allocation4 + $0x8] sm:$0xf]
    %v595 = vld [vmem:[#allocation4 + $0xc] sm:$0xf]
    %v596 = vld [vmem:[#allocation4 + $0x10] sm:$0xf]
    %v597 = vld [vmem:[#allocation4 + $0x14] sm:$0xf]
    %v598 = vld [vmem:[#allocation4 + $0x18] sm:$0xf]
    %v599 = vld [vmem:[#allocation4 + $0x1c] sm:$0xf]
    %v600 = vld [vmem:[#allocation4 + $0x20] sm:$0xf]
    %v601 = vld [vmem:[#allocation4 + $0x24] sm:$0xf]
    %v602 = vld [vmem:[#allocation4 + $0x28] sm:$0xf]
    %v603 = vld [vmem:[#allocation4 + $0x2c] sm:$0xf]
    %v604 = vld [vmem:[#allocation4 + $0x30] sm:$0xf]
    %v605 = vld [vmem:[#allocation4 + $0x34] sm:$0xf]
    %v606 = vld [vmem:[#allocation4 + $0x38] sm:$0xf]
    %v607 = vld [vmem:[#allocation4 + $0x3c] sm:$0xf]
    %v608 = vld [vmem:[#allocation4 + $0x40] sm:$0xf]
    %v609 = vld [vmem:[#allocation4 + $0x44] sm:$0xf]
    %v610 = vld [vmem:[#allocation4 + $0x48] sm:$0xf]
    %v611 = vld [vmem:[#allocation4 + $0x4c] sm:$0xf]
    %v612 = vld [vmem:[#allocation4 + $0x50] sm:$0xf]
    %v613 = vld [vmem:[#allocation4 + $0x54] sm:$0xf]
    %v614 = vld [vmem:[#allocation4 + $0x58] sm:$0xf]
    %v615 = vld [vmem:[#allocation4 + $0x5c] sm:$0xf]
    %v616 = vld [vmem:[#allocation4 + $0x60] sm:$0xf]
    %v617 = vld [vmem:[#allocation4 + $0x64] sm:$0xf]
    %v618 = vld [vmem:[#allocation4 + $0x68] sm:$0xf]
    %v619 = vld [vmem:[#allocation4 + $0x6c] sm:$0xf]
    %v620 = vld [vmem:[#allocation4 + $0x70] sm:$0xf]
    %v621 = vld [vmem:[#allocation4 + $0x74] sm:$0xf]
    %v622 = vld [vmem:[#allocation4 + $0x78] sm:$0xf]
    %v623 = vld [vmem:[#allocation4 + $0x7c] sm:$0xf]
    %v624 = vld [vmem:[#allocation4 + $0x80] sm:$0xf]
    %v625 = vld [vmem:[#allocation4 + $0x84] sm:$0xf]
    %v626 = vld [vmem:[#allocation4 + $0x88] sm:$0xf]
    %v627 = vld [vmem:[#allocation4 + $0x8c] sm:$0xf]
    %v628 = vld [vmem:[#allocation4 + $0x90] sm:$0xf]
    %v629 = vld [vmem:[#allocation4 + $0x94] sm:$0xf]
    %v630 = vld [vmem:[#allocation4 + $0x98] sm:$0xf]
    %v631 = vld [vmem:[#allocation4 + $0x9c] sm:$0xf]
    %v632 = vld [vmem:[#allocation4 + $0xa0] sm:$0xf]
    %v633 = vld [vmem:[#allocation4 + $0xa4] sm:$0xf]
    %v634 = vld [vmem:[#allocation4 + $0xa8] sm:$0xf]
    %v635 = vld [vmem:[#allocation4 + $0xac] sm:$0xf]
    %v636 = vld [vmem:[#allocation4 + $0xb0] sm:$0xf]
    %v637 = vld [vmem:[#allocation4 + $0xb4] sm:$0xf]
    %v638 = vld [vmem:[#allocation4 + $0xb8] sm:$0xf]
    %v639 = vld [vmem:[#allocation4 + $0xbc] sm:$0xf]
    %v640 = vld [vmem:[#allocation4 + $0xc0] sm:$0xf]
    %v641 = vld [vmem:[#allocation4 + $0xc4] sm:$0xf]
    %v642 = vld [vmem:[#allocation4 + $0xc8] sm:$0xf]
    %v643 = vld [vmem:[#allocation4 + $0xcc] sm:$0xf]
    %v644 = vld [vmem:[#allocation4 + $0xd0] sm:$0xf]
    %v645 = vld [vmem:[#allocation4 + $0xd4] sm:$0xf]
    %v646 = vld [vmem:[#allocation4 + $0xd8] sm:$0xf]
    %v647 = vld [vmem:[#allocation4 + $0xdc] sm:$0xf]
    %v648 = vld [vmem:[#allocation4 + $0xe0] sm:$0xf]
    %v649 = vld [vmem:[#allocation4 + $0xe4] sm:$0xf]
    %v650 = vld [vmem:[#allocation4 + $0xe8] sm:$0xf]
    %v651 = vld [vmem:[#allocation4 + $0xec] sm:$0xf]
    %v652 = vld [vmem:[#allocation4 + $0xf0] sm:$0xf]
    %v653 = vld [vmem:[#allocation4 + $0xf4] sm:$0xf]
    %v654 = vld [vmem:[#allocation4 + $0xf8] sm:$0xf]
    %v655 = vld [vmem:[#allocation4 + $0xfc] sm:$0xf]
    %v656 = vld [vmem:[#allocation4 + $0x100] sm:$0xf]
    %v657 = vld [vmem:[#allocation4 + $0x104] sm:$0xf]
    %v658 = vld [vmem:[#allocation4 + $0x108] sm:$0xf]
    %v659 = vld [vmem:[#allocation4 + $0x10c] sm:$0xf]
    %v660 = vld [vmem:[#allocation4 + $0x110] sm:$0xf]
    %v661 = vld [vmem:[#allocation4 + $0x114] sm:$0xf]
    %v662 = vld [vmem:[#allocation4 + $0x118] sm:$0xf]
    %v663 = vld [vmem:[#allocation4 + $0x11c] sm:$0xf]
    %v664 = vld [vmem:[#allocation4 + $0x120] sm:$0xf]
    %v665 = vld [vmem:[#allocation4 + $0x124] sm:$0xf]
    %v666 = vld [vmem:[#allocation4 + $0x128] sm:$0xf]
    %v667 = vld [vmem:[#allocation4 + $0x12c] sm:$0xf]
    %v668 = vld [vmem:[#allocation4 + $0x130] sm:$0xf]
    %v669 = vld [vmem:[#allocation4 + $0x134] sm:$0xf]
    %v670 = vld [vmem:[#allocation4 + $0x138] sm:$0xf]
    %v671 = vld [vmem:[#allocation4 + $0x13c] sm:$0xf]
    %v672 = vld [vmem:[%s5] sm:$0x1]
    %v674 = vlaneseq
    %v675 = vshrl.u32 %v674, 7
    %v676 = vsub.s32 0, %v675
    %v677 = vrot.slane %v672, %v676
    %v759 = vunpack.c.l.b16 %v592
    %v760 = vunpack.c.l.b16 %v593
    %v761 = vunpack.c.l.b16 %v594
    %v762 = vunpack.c.l.b16 %v595
    %v763 = vunpack.c.l.b16 %v596
    %v764 = vunpack.c.l.b16 %v597
    %v765 = vunpack.c.l.b16 %v598
    %v766 = vunpack.c.l.b16 %v599
    %v767 = vunpack.c.l.b16 %v600
    %v768 = vunpack.c.l.b16 %v601
    %v769 = vunpack.c.l.b16 %v602
    %v770 = vunpack.c.l.b16 %v603
    %v771 = vunpack.c.l.b16 %v604
    %v772 = vunpack.c.l.b16 %v605
    %v773 = vunpack.c.l.b16 %v606
    %v774 = vunpack.c.l.b16 %v607
    %v775 = vunpack.c.l.b16 %v608
    %v776 = vunpack.c.l.b16 %v609
    %v777 = vunpack.c.l.b16 %v610
    %v778 = vunpack.c.l.b16 %v611
    %v779 = vunpack.c.l.b16 %v612
    %v780 = vunpack.c.l.b16 %v613
    %v781 = vunpack.c.l.b16 %v614
    %v782 = vunpack.c.l.b16 %v615
    %v783 = vunpack.c.l.b16 %v616
    %v784 = vunpack.c.l.b16 %v617
    %v785 = vunpack.c.l.b16 %v618
    %v786 = vunpack.c.l.b16 %v619
    %v787 = vunpack.c.l.b16 %v620
    %v788 = vunpack.c.l.b16 %v621
    %v789 = vunpack.c.l.b16 %v622
    %v790 = vunpack.c.l.b16 %v623
    %v791 = vunpack.c.l.b16 %v624
    %v792 = vunpack.c.l.b16 %v625
    %v793 = vunpack.c.l.b16 %v626
    %v794 = vunpack.c.l.b16 %v627
    %v795 = vunpack.c.l.b16 %v628
    %v796 = vunpack.c.l.b16 %v629
    %v797 = vunpack.c.l.b16 %v630
    %v798 = vunpack.c.l.b16 %v631
    %v799 = vunpack.c.l.b16 %v632
    %v800 = vunpack.c.l.b16 %v633
    %v801 = vunpack.c.l.b16 %v634
    %v802 = vunpack.c.l.b16 %v635
    %v803 = vunpack.c.l.b16 %v636
    %v804 = vunpack.c.l.b16 %v637
    %v805 = vunpack.c.l.b16 %v638
    %v806 = vunpack.c.l.b16 %v639
    %v807 = vunpack.c.l.b16 %v640
    %v808 = vunpack.c.l.b16 %v641
    %v809 = vunpack.c.l.b16 %v642
    %v810 = vunpack.c.l.b16 %v643
    %v811 = vunpack.c.l.b16 %v644
    %v812 = vunpack.c.l.b16 %v645
    %v813 = vunpack.c.l.b16 %v646
    %v814 = vunpack.c.l.b16 %v647
    %v815 = vunpack.c.l.b16 %v648
    %v816 = vunpack.c.l.b16 %v649
    %v817 = vunpack.c.l.b16 %v650
    %v818 = vunpack.c.l.b16 %v651
    %v819 = vunpack.c.l.b16 %v652
    %v820 = vunpack.c.l.b16 %v653
    %v821 = vunpack.c.l.b16 %v654
    %v822 = vunpack.c.l.b16 %v655
    %v823 = vunpack.c.l.b16 %v656
    %v824 = vunpack.c.l.b16 %v657
    %v825 = vunpack.c.l.b16 %v658
    %v826 = vunpack.c.l.b16 %v659
    %v827 = vunpack.c.l.b16 %v660
    %v828 = vunpack.c.l.b16 %v661
    %v829 = vunpack.c.l.b16 %v662
    %v830 = vunpack.c.l.b16 %v663
    %v831 = vunpack.c.l.b16 %v664
    %v832 = vunpack.c.l.b16 %v665
    %v833 = vunpack.c.l.b16 %v666
    %v834 = vunpack.c.l.b16 %v667
    %v835 = vunpack.c.l.b16 %v668
    %v836 = vunpack.c.l.b16 %v669
    %v837 = vunpack.c.l.b16 %v670
    %v838 = vunpack.c.l.b16 %v671
    %v839 = vpack.c.b16 %v760, %v759
    %v840 = vpack.c.b16 %v762, %v761
    %v841 = vpack.c.b16 %v764, %v763
    %v842 = vpack.c.b16 %v766, %v765
    %v843 = vpack.c.b16 %v768, %v767
    %v844 = vpack.c.b16 %v770, %v769
    %v845 = vpack.c.b16 %v772, %v771
    %v846 = vpack.c.b16 %v774, %v773
    %v847 = vpack.c.b16 %v776, %v775
    %v848 = vpack.c.b16 %v778, %v777
    %v849 = vpack.c.b16 %v780, %v779
    %v850 = vpack.c.b16 %v782, %v781
    %v851 = vpack.c.b16 %v784, %v783
    %v852 = vpack.c.b16 %v786, %v785
    %v853 = vpack.c.b16 %v788, %v787
    %v854 = vpack.c.b16 %v790, %v789
    %v855 = vpack.c.b16 %v792, %v791
    %v856 = vpack.c.b16 %v794, %v793
    %v857 = vpack.c.b16 %v796, %v795
    %v858 = vpack.c.b16 %v798, %v797
    %v859 = vpack.c.b16 %v800, %v799
    %v860 = vpack.c.b16 %v802, %v801
    %v861 = vpack.c.b16 %v804, %v803
    %v862 = vpack.c.b16 %v806, %v805
    %v863 = vpack.c.b16 %v808, %v807
    %v864 = vpack.c.b16 %v810, %v809
    %v865 = vpack.c.b16 %v812, %v811
    %v866 = vpack.c.b16 %v814, %v813
    %v867 = vpack.c.b16 %v816, %v815
    %v868 = vpack.c.b16 %v818, %v817
    %v869 = vpack.c.b16 %v820, %v819
    %v870 = vpack.c.b16 %v822, %v821
    %v871 = vpack.c.b16 %v824, %v823
    %v872 = vpack.c.b16 %v826, %v825
    %v873 = vpack.c.b16 %v828, %v827
    %v874 = vpack.c.b16 %v830, %v829
    %v875 = vpack.c.b16 %v832, %v831
    %v876 = vpack.c.b16 %v834, %v833
    %v877 = vpack.c.b16 %v836, %v835
    %v878 = vpack.c.b16 %v838, %v837
    %919 = vmatprep.subr.bf16.mxu0 0
    %920 = vmatpush1.bf16.msra.mxu0 %v846
    %921 = vmatprep.subr.bf16.mxu0 0
    %922 = vmatpush1.bf16.msra.mxu0 %v845
    %923 = vmatprep.subr.bf16.mxu0 0
    %924 = vmatpush1.bf16.msra.mxu0 %v844
    %925 = vmatprep.subr.bf16.mxu0 0
    %926 = vmatpush1.bf16.msra.mxu0 %v843
    %927 = vmatprep.subr.bf16.mxu0 0
    %928 = vmatpush1.bf16.msra.mxu0 %v842
    %929 = vmatprep.subr.bf16.mxu0 0
    %930 = vmatpush1.bf16.msra.mxu0 %v841
    %931 = vmatprep.subr.bf16.mxu0 0
    %932 = vmatpush1.bf16.msra.mxu0 %v840
    %933 = vmatprep.subr.bf16.mxu0 0
    %934 = vmatpush1.bf16.msra.mxu0 %v839
    %935 = vmatprep.subr.bf16.mxu0 0
    %936 = vmatpush2.bf16.msra.mxu0 %v854
    %937 = vmatprep.subr.bf16.mxu0 0
    %938 = vmatpush2.bf16.msra.mxu0 %v853
    %939 = vmatprep.subr.bf16.mxu0 0
    %940 = vmatpush2.bf16.msra.mxu0 %v852
    %941 = vmatprep.subr.bf16.mxu0 0
    %942 = vmatpush2.bf16.msra.mxu0 %v851
    %943 = vmatprep.subr.bf16.mxu0 0
    %944 = vmatpush2.bf16.msra.mxu0 %v850
    %945 = vmatprep.subr.bf16.mxu0 0
    %946 = vmatpush2.bf16.msra.mxu0 %v849
    %947 = vmatprep.subr.bf16.mxu0 0
    %948 = vmatpush2.bf16.msra.mxu0 %v848
    %949 = vmatprep.subr.bf16.mxu0 0
    %950 = vmatpush2.bf16.msra.mxu0 %v847
    %951 = vmatprep.mubr.bf16.mxu0 %v588
    %952 = vmatmul.mubr.bf16.gmra.mxu0 %v587
    %v953 = vpop.f32.mrf.mxu0
    %v954 = vadd.f32 %v677, %v953
    %v955 = vpop.f32.mrf.mxu0
    %v956 = vpop.f32.mrf.mxu0
    %v957 = vpop.f32.mrf.mxu0
    %958 = vdwg.mxu0
    %959 = vmatprep.subr.bf16.mxu0 0
    %960 = vmatpush1.bf16.msra.mxu0 %v862
    %961 = vmatprep.subr.bf16.mxu0 0
    %962 = vmatpush1.bf16.msra.mxu0 %v861
    %963 = vmatprep.subr.bf16.mxu0 0
    %964 = vmatpush1.bf16.msra.mxu0 %v860
    %965 = vmatprep.subr.bf16.mxu0 0
    %966 = vmatpush1.bf16.msra.mxu0 %v859
    %967 = vmatprep.subr.bf16.mxu0 0
    %968 = vmatpush1.bf16.msra.mxu0 %v858
    %969 = vmatprep.subr.bf16.mxu0 0
    %970 = vmatpush1.bf16.msra.mxu0 %v857
    %971 = vmatprep.subr.bf16.mxu0 0
    %972 = vmatpush1.bf16.msra.mxu0 %v856
    %973 = vmatprep.subr.bf16.mxu0 0
    %974 = vmatpush1.bf16.msra.mxu0 %v855
    %975 = vmatprep.subr.bf16.mxu0 0
    %976 = vmatpush2.bf16.msra.mxu0 %v870
    %977 = vmatprep.subr.bf16.mxu0 0
    %978 = vmatpush2.bf16.msra.mxu0 %v869
    %979 = vmatprep.subr.bf16.mxu0 0
    %980 = vmatpush2.bf16.msra.mxu0 %v868
    %981 = vmatprep.subr.bf16.mxu0 0
    %982 = vmatpush2.bf16.msra.mxu0 %v867
    %983 = vmatprep.subr.bf16.mxu0 0
    %984 = vmatpush2.bf16.msra.mxu0 %v866
    %985 = vmatprep.subr.bf16.mxu0 0
    %986 = vmatpush2.bf16.msra.mxu0 %v865
    %987 = vmatprep.subr.bf16.mxu0 0
    %988 = vmatpush2.bf16.msra.mxu0 %v864
    %989 = vmatprep.subr.bf16.mxu0 0
    %990 = vmatpush2.bf16.msra.mxu0 %v863
    %991 = vmatprep.mubr.bf16.mxu0 %v590
    %992 = vmatmul.mubr.bf16.gmra.mxu0 %v589
    %v993 = vpop.f32.mrf.mxu0
    %v994 = vadd.f32 %v954, %v993
    %v995 = vpop.f32.mrf.mxu0
    %v996 = vpop.f32.mrf.mxu0
    %v997 = vpop.f32.mrf.mxu0
    %998 = vdwg.mxu0
    %999 = vmatprep.subr.bf16.mxu0 0
    %1000 = vmatpush1.bf16.msra.mxu0 %v878
    %1001 = vmatprep.subr.bf16.mxu0 0
    %1002 = vmatpush1.bf16.msra.mxu0 %v877
    %1003 = vmatprep.subr.bf16.mxu0 0
    %1004 = vmatpush1.bf16.msra.mxu0 %v876
    %1005 = vmatprep.subr.bf16.mxu0 0
    %1006 = vmatpush1.bf16.msra.mxu0 %v875
    %1007 = vmatprep.subr.bf16.mxu0 0
    %1008 = vmatpush1.bf16.msra.mxu0 %v874
    %1009 = vmatprep.subr.bf16.mxu0 0
    %1010 = vmatpush1.bf16.msra.mxu0 %v873
    %1011 = vmatprep.subr.bf16.mxu0 0
    %1012 = vmatpush1.bf16.msra.mxu0 %v872
    %1013 = vmatprep.subr.bf16.mxu0 0
    %1014 = vmatpush1.bf16.msra.mxu0 %v871
    %1015 = vmatprep.subr.bf16.mxu0 0
    %1016 = vmatpush2.bf16.msra.mxu0 0
    %1017 = vmatprep.subr.bf16.mxu0 0
    %1018 = vmatpush2.bf16.msra.mxu0 0
    %1019 = vmatprep.subr.bf16.mxu0 0
    %1020 = vmatpush2.bf16.msra.mxu0 0
    %1021 = vmatprep.subr.bf16.mxu0 0
    %1022 = vmatpush2.bf16.msra.mxu0 0
    %1023 = vmatprep.subr.bf16.mxu0 0
    %1024 = vmatpush2.bf16.msra.mxu0 0
    %1025 = vmatprep.subr.bf16.mxu0 0
    %1026 = vmatpush2.bf16.msra.mxu0 0
    %1027 = vmatprep.subr.bf16.mxu0 0
    %1028 = vmatpush2.bf16.msra.mxu0 0
    %1029 = vmatprep.subr.bf16.mxu0 0
    %1030 = vmatpush2.bf16.msra.mxu0 0
    %1031 = vmatprep.mubr.bf16.mxu0 0
    %1032 = vmatmul.mubr.bf16.gmra.mxu0 %v591
    %v1033 = vpop.f32.mrf.mxu0
    %v1034 = vadd.f32 %v994, %v1033
    %v1035 = vpop.f32.mrf.mxu0
    %v1036 = vpop.f32.mrf.mxu0
    %v1037 = vpop.f32.mrf.mxu0
    %1038 = vdwg.mxu0
    %v1039 = vmax.f32 %v1034, 0.0
    %v1040 = vld [vmem:[%s6] sm:$0xff]
    %v1041 = vld [vmem:[%s6 + $0x8] sm:$0xff]
    %v1042 = vld [vmem:[%s6 + $0x10] sm:$0xff]
    %v1043 = vld [vmem:[%s6 + $0x18] sm:$0xff]
    %v1044 = vld [vmem:[%s6 + $0x20] sm:$0xff]
    %v1045 = vld [vmem:[%s6 + $0x28] sm:$0xff]
    %v1046 = vld [vmem:[%s6 + $0x30] sm:$0xff]
    %v1047 = vld [vmem:[%s6 + $0x38] sm:$0xff]
    %v1048 = vld [vmem:[%s6 + $0x40] sm:$0xff]
    %v1049 = vld [vmem:[%s6 + $0x48] sm:$0xff]
    %v1050 = vld [vmem:[%s6 + $0x50] sm:$0xff]
    %v1051 = vld [vmem:[%s6 + $0x58] sm:$0xff]
    %v1052 = vld [vmem:[%s6 + $0x60] sm:$0xff]
    %v1053 = vld [vmem:[%s6 + $0x68] sm:$0xff]
    %v1054 = vld [vmem:[%s6 + $0x70] sm:$0xff]
    %v1055 = vld [vmem:[%s6 + $0x78] sm:$0xff]
    %v1056 = vld [vmem:[%s7] sm:$0x1]
    %v1058 = vlaneseq
    %v1059 = vshrl.u32 %v1058, 7
    %v1060 = vsub.s32 0, %v1059
    %v1061 = vrot.slane %v1056, %v1060
    %1063 = vmatprep.subr.mxu0 0.0
    %1064 = vmatpush1.msra.mxu0 %v1055
    %1065 = vmatprep.subr.mxu0 0.0
    %1066 = vmatpush1.msra.mxu0 %v1054
    %1067 = vmatprep.subr.mxu0 0.0
    %1068 = vmatpush1.msra.mxu0 %v1053
    %1069 = vmatprep.subr.mxu0 0.0
    %1070 = vmatpush1.msra.mxu0 %v1052
    %1071 = vmatprep.subr.mxu0 0.0
    %1072 = vmatpush1.msra.mxu0 %v1051
    %1073 = vmatprep.subr.mxu0 0.0
    %1074 = vmatpush1.msra.mxu0 %v1050
    %1075 = vmatprep.subr.mxu0 0.0
    %1076 = vmatpush1.msra.mxu0 %v1049
    %1077 = vmatprep.subr.mxu0 0.0
    %1078 = vmatpush1.msra.mxu0 %v1048
    %1079 = vmatprep.subr.mxu0 0.0
    %1080 = vmatpush1.msra.mxu0 %v1047
    %1081 = vmatprep.subr.mxu0 0.0
    %1082 = vmatpush1.msra.mxu0 %v1046
    %1083 = vmatprep.subr.mxu0 0.0
    %1084 = vmatpush1.msra.mxu0 %v1045
    %1085 = vmatprep.subr.mxu0 0.0
    %1086 = vmatpush1.msra.mxu0 %v1044
    %1087 = vmatprep.subr.mxu0 0.0
    %1088 = vmatpush1.msra.mxu0 %v1043
    %1089 = vmatprep.subr.mxu0 0.0
    %1090 = vmatpush1.msra.mxu0 %v1042
    %1091 = vmatprep.subr.mxu0 0.0
    %1092 = vmatpush1.msra.mxu0 %v1041
    %1093 = vmatprep.subr.mxu0 0.0
    %1094 = vmatpush1.msra.mxu0 %v1040
    %1095 = vmatprep.subr.mxu0 0.0
    %1096 = vmatpush2.msra.mxu0 0.0
    %1097 = vmatprep.subr.mxu0 0.0
    %1098 = vmatpush2.msra.mxu0 0.0
    %1099 = vmatprep.subr.mxu0 0.0
    %1100 = vmatpush2.msra.mxu0 0.0
    %1101 = vmatprep.subr.mxu0 0.0
    %1102 = vmatpush2.msra.mxu0 0.0
    %1103 = vmatprep.subr.mxu0 0.0
    %1104 = vmatpush2.msra.mxu0 0.0
    %1105 = vmatprep.subr.mxu0 0.0
    %1106 = vmatpush2.msra.mxu0 0.0
    %1107 = vmatprep.subr.mxu0 0.0
    %1108 = vmatpush2.msra.mxu0 0.0
    %1109 = vmatprep.subr.mxu0 0.0
    %1110 = vmatpush2.msra.mxu0 0.0
    %1111 = vmatprep.subr.mxu0 0.0
    %1112 = vmatpush2.msra.mxu0 0.0
    %1113 = vmatprep.subr.mxu0 0.0
    %1114 = vmatpush2.msra.mxu0 0.0
    %1115 = vmatprep.subr.mxu0 0.0
    %1116 = vmatpush2.msra.mxu0 0.0
    %1117 = vmatprep.subr.mxu0 0.0
    %1118 = vmatpush2.msra.mxu0 0.0
    %1119 = vmatprep.subr.mxu0 0.0
    %1120 = vmatpush2.msra.mxu0 0.0
    %1121 = vmatprep.subr.mxu0 0.0
    %1122 = vmatpush2.msra.mxu0 0.0
    %1123 = vmatprep.subr.mxu0 0.0
    %1124 = vmatpush2.msra.mxu0 0.0
    %1125 = vmatprep.subr.mxu0 0.0
    %1126 = vmatpush2.msra.mxu0 0.0
    %1127 = vmatprep.mubr.f32.mxu0 0.0
    %1128 = vmatmul.mubr.f32.gmra.mxu0 %v1039
    %v1129 = vpop.f32.mrf.mxu0
    %v1130 = vadd.f32 %v1061, %v1129
    %v1131 = vpop.f32.mrf.mxu0
    %1132 = vdwg.mxu0
    %v1133 = vld [vmem:[%s1] sm:$0xff]
    %v1134 = vmul.f32 %v1130, 0.5
    %v1135 = vmul.f32 %v1134, 1.442695
    %v1136 = vpow.pop %v1135
    %1138 = vrot.lane.b32.xlu0 %v1136, 126
    %v1139 = vpop.permute.xlu0 %1138
    %v1141 = vmul.f32 %v1133, %v1139
    %v1142 = vadd.f32 %v1130, %v1141
    %v1143 = vld [vmem:[%s8] sm:$0x1]
    %1145 = vset.pattern.permute.xlu0 0
    %1146 = vperm.xlu0 %1145, %v1142
    %v1147 = vpop.permute.xlu0 %1146
    %v1149 = vlaneseq
    %v1150 = vshrl.u32 %v1149, 7
    %v1151 = vsub.s32 0, %v1150
    %v1152 = vrot.slane %v1143, %v1151
    %v1153 = vmul.f32 %v1147, %v1152
    %v1154 = vld [vmem:[%s8 + $0x1] sm:$0x1]
    %1155 = vset.pattern.permute.xlu0 1
    %1156 = vperm.xlu0 %1155, %v1142
    %v1157 = vpop.permute.xlu0 %1156
    %v1159 = vlaneseq
    %v1160 = vshrl.u32 %v1159, 7
    %v1161 = vsub.s32 0, %v1160
    %v1162 = vrot.slane %v1154, %v1161
    %v1163 = vmul.f32 %v1157, %v1162
    %v1164 = vadd.f32 %v1153, %v1163
    %v1165 = vld [vmem:[%s9] sm:$0x1]
    %v1167 = vlaneseq
    %v1168 = vshrl.u32 %v1167, 7
    %v1169 = vsub.s32 0, %v1168
    %v1170 = vrot.slane %v1165, %v1169
    %v1172 = vadd.f32 %v1164, %v1170
    %v1173 = vmax.f32 %v1172, 0.0
    %v1174 = vpack.c.bf16 %v1173, %v1173
    %v1175 = vld [vmem:[#allocation6] sm:$0xff]
    %v1176 = vld [vmem:[#allocation6 + $0x8] sm:$0xff]
    %v1177 = vld [vmem:[#allocation6 + $0x10] sm:$0xff]
    %v1178 = vld [vmem:[#allocation6 + $0x18] sm:$0xf]
    %v1179 = vld [vmem:[#allocation6 + $0x1c] sm:$0xff]
    %v1180 = vld [vmem:[#allocation6 + $0x24] sm:$0xff]
    %v1181 = vld [vmem:[#allocation6 + $0x2c] sm:$0xff]
    %v1182 = vld [vmem:[#allocation6 + $0x34] sm:$0xf]
    %v1183 = vld [vmem:[#allocation6 + $0x38] sm:$0xff]
    %v1184 = vld [vmem:[#allocation6 + $0x40] sm:$0xff]
    %v1185 = vld [vmem:[#allocation6 + $0x48] sm:$0xff]
    %v1186 = vld [vmem:[#allocation6 + $0x50] sm:$0xf]
    %v1187 = vld [vmem:[#allocation6 + $0x54] sm:$0xff]
    %v1188 = vld [vmem:[#allocation6 + $0x5c] sm:$0xff]
    %v1189 = vld [vmem:[#allocation6 + $0x64] sm:$0xff]
    %v1190 = vld [vmem:[#allocation6 + $0x6c] sm:$0xf]
    %v1191 = vld [vmem:[#allocation6 + $0x70] sm:$0xff]
    %v1192 = vld [vmem:[#allocation6 + $0x78] sm:$0xff]
    %v1193 = vld [vmem:[#allocation6 + $0x80] sm:$0xff]
    %v1194 = vld [vmem:[#allocation6 + $0x88] sm:$0xf]
    %v1195 = vld [vmem:[#allocation6 + $0x8c] sm:$0xff]
    %v1196 = vld [vmem:[#allocation6 + $0x94] sm:$0xff]
    %v1197 = vld [vmem:[#allocation6 + $0x9c] sm:$0xff]
    %v1198 = vld [vmem:[#allocation6 + $0xa4] sm:$0xf]
    %v1199 = vld [vmem:[#allocation6 + $0xa8] sm:$0xff]
    %v1200 = vld [vmem:[#allocation6 + $0xb0] sm:$0xff]
    %v1201 = vld [vmem:[#allocation6 + $0xb8] sm:$0xff]
    %v1202 = vld [vmem:[#allocation6 + $0xc0] sm:$0xf]
    %v1203 = vld [vmem:[#allocation6 + $0xc4] sm:$0xff]
    %v1204 = vld [vmem:[#allocation6 + $0xcc] sm:$0xff]
    %v1205 = vld [vmem:[#allocation6 + $0xd4] sm:$0xff]
    %v1206 = vld [vmem:[#allocation6 + $0xdc] sm:$0xf]
    %v1207 = vld [vmem:[#allocation6 + $0xe0] sm:$0xff]
    %v1208 = vld [vmem:[#allocation6 + $0xe8] sm:$0xff]
    %v1209 = vld [vmem:[#allocation6 + $0xf0] sm:$0xff]
    %v1210 = vld [vmem:[#allocation6 + $0xf8] sm:$0xf]
    %v1211 = vld [vmem:[#allocation6 + $0xfc] sm:$0xff]
    %v1212 = vld [vmem:[#allocation6 + $0x104] sm:$0xff]
    %v1213 = vld [vmem:[#allocation6 + $0x10c] sm:$0xff]
    %v1214 = vld [vmem:[#allocation6 + $0x114] sm:$0xf]
    %v1215 = vld [vmem:[#allocation6 + $0x118] sm:$0xff]
    %v1216 = vld [vmem:[#allocation6 + $0x120] sm:$0xff]
    %v1217 = vld [vmem:[#allocation6 + $0x128] sm:$0xff]
    %v1218 = vld [vmem:[#allocation6 + $0x130] sm:$0xf]
    %v1219 = vld [vmem:[#allocation6 + $0x134] sm:$0xff]
    %v1220 = vld [vmem:[#allocation6 + $0x13c] sm:$0xff]
    %v1221 = vld [vmem:[#allocation6 + $0x144] sm:$0xff]
    %v1222 = vld [vmem:[#allocation6 + $0x14c] sm:$0xf]
    %v1223 = vld [vmem:[#allocation6 + $0x150] sm:$0xff]
    %v1224 = vld [vmem:[#allocation6 + $0x158] sm:$0xff]
    %v1225 = vld [vmem:[#allocation6 + $0x160] sm:$0xff]
    %v1226 = vld [vmem:[#allocation6 + $0x168] sm:$0xf]
    %v1227 = vld [vmem:[#allocation6 + $0x16c] sm:$0xff]
    %v1228 = vld [vmem:[#allocation6 + $0x174] sm:$0xff]
    %v1229 = vld [vmem:[#allocation6 + $0x17c] sm:$0xff]
    %v1230 = vld [vmem:[#allocation6 + $0x184] sm:$0xf]
    %v1231 = vld [vmem:[#allocation6 + $0x188] sm:$0xff]
    %v1232 = vld [vmem:[#allocation6 + $0x190] sm:$0xff]
    %v1233 = vld [vmem:[#allocation6 + $0x198] sm:$0xff]
    %v1234 = vld [vmem:[#allocation6 + $0x1a0] sm:$0xf]
    %v1235 = vld [vmem:[#allocation6 + $0x1a4] sm:$0xff]
    %v1236 = vld [vmem:[#allocation6 + $0x1ac] sm:$0xff]
    %v1237 = vld [vmem:[#allocation6 + $0x1b4] sm:$0xff]
    %v1238 = vld [vmem:[#allocation6 + $0x1bc] sm:$0xf]
    %v1239 = vld [vmem:[%s11] sm:$0xff]
    %v1241 = vlaneseq
    %v1242 = vshrl.u32 %v1241, 7
    %v1243 = vsub.s32 0, %v1242
    %v1244 = vrot.slane %v1239, %v1243
    %v1245 = vlaneseq
    %v1246 = vshrl.u32 %v1245, 7
    %v1247 = vsub.s32 1, %v1246
    %v1248 = vrot.slane %v1239, %v1247
    %v1249 = vlaneseq
    %v1250 = vshrl.u32 %v1249, 7
    %v1251 = vsub.s32 2, %v1250
    %v1252 = vrot.slane %v1239, %v1251
    %v1253 = vlaneseq
    %v1254 = vshrl.u32 %v1253, 7
    %v1255 = vsub.s32 3, %v1254
    %v1256 = vrot.slane %v1239, %v1255
    %v1257 = vlaneseq
    %v1258 = vshrl.u32 %v1257, 7
    %v1259 = vsub.s32 4, %v1258
    %v1260 = vrot.slane %v1239, %v1259
    %v1261 = vlaneseq
    %v1262 = vshrl.u32 %v1261, 7
    %v1263 = vsub.s32 5, %v1262
    %v1264 = vrot.slane %v1239, %v1263
    %v1265 = vlaneseq
    %v1266 = vshrl.u32 %v1265, 7
    %v1267 = vsub.s32 6, %v1266
    %v1268 = vrot.slane %v1239, %v1267
    %v1340 = vunpack.c.l.b16 %v1175
    %v1341 = vunpack.c.h.b16 %v1175
    %v1342 = vunpack.c.l.b16 %v1176
    %v1343 = vunpack.c.h.b16 %v1176
    %v1344 = vunpack.c.l.b16 %v1177
    %v1345 = vunpack.c.h.b16 %v1177
    %v1346 = vunpack.c.l.b16 %v1178
    %v1347 = vunpack.c.l.b16 %v1179
    %v1348 = vunpack.c.h.b16 %v1179
    %v1349 = vunpack.c.l.b16 %v1180
    %v1350 = vunpack.c.h.b16 %v1180
    %v1351 = vunpack.c.l.b16 %v1181
    %v1352 = vunpack.c.h.b16 %v1181
    %v1353 = vunpack.c.l.b16 %v1182
    %v1354 = vunpack.c.l.b16 %v1183
    %v1355 = vunpack.c.h.b16 %v1183
    %v1356 = vunpack.c.l.b16 %v1184
    %v1357 = vunpack.c.h.b16 %v1184
    %v1358 = vunpack.c.l.b16 %v1185
    %v1359 = vunpack.c.h.b16 %v1185
    %v1360 = vunpack.c.l.b16 %v1186
    %v1361 = vunpack.c.l.b16 %v1187
    %v1362 = vunpack.c.h.b16 %v1187
    %v1363 = vunpack.c.l.b16 %v1188
    %v1364 = vunpack.c.h.b16 %v1188
    %v1365 = vunpack.c.l.b16 %v1189
    %v1366 = vunpack.c.h.b16 %v1189
    %v1367 = vunpack.c.l.b16 %v1190
    %v1368 = vunpack.c.l.b16 %v1191
    %v1369 = vunpack.c.h.b16 %v1191
    %v1370 = vunpack.c.l.b16 %v1192
    %v1371 = vunpack.c.h.b16 %v1192
    %v1372 = vunpack.c.l.b16 %v1193
    %v1373 = vunpack.c.h.b16 %v1193
    %v1374 = vunpack.c.l.b16 %v1194
    %v1375 = vunpack.c.l.b16 %v1195
    %v1376 = vunpack.c.h.b16 %v1195
    %v1377 = vunpack.c.l.b16 %v1196
    %v1378 = vunpack.c.h.b16 %v1196
    %v1379 = vunpack.c.l.b16 %v1197
    %v1380 = vunpack.c.h.b16 %v1197
    %v1381 = vunpack.c.l.b16 %v1198
    %v1382 = vunpack.c.l.b16 %v1199
    %v1383 = vunpack.c.h.b16 %v1199
    %v1384 = vunpack.c.l.b16 %v1200
    %v1385 = vunpack.c.h.b16 %v1200
    %v1386 = vunpack.c.l.b16 %v1201
    %v1387 = vunpack.c.h.b16 %v1201
    %v1388 = vunpack.c.l.b16 %v1202
    %v1389 = vunpack.c.l.b16 %v1203
    %v1390 = vunpack.c.h.b16 %v1203
    %v1391 = vunpack.c.l.b16 %v1204
    %v1392 = vunpack.c.h.b16 %v1204
    %v1393 = vunpack.c.l.b16 %v1205
    %v1394 = vunpack.c.h.b16 %v1205
    %v1395 = vunpack.c.l.b16 %v1206
    %v1396 = vunpack.c.l.b16 %v1207
    %v1397 = vunpack.c.h.b16 %v1207
    %v1398 = vunpack.c.l.b16 %v1208
    %v1399 = vunpack.c.h.b16 %v1208
    %v1400 = vunpack.c.l.b16 %v1209
    %v1401 = vunpack.c.h.b16 %v1209
    %v1402 = vunpack.c.l.b16 %v1210
    %v1403 = vunpack.c.l.b16 %v1211
    %v1404 = vunpack.c.h.b16 %v1211
    %v1405 = vunpack.c.l.b16 %v1212
    %v1406 = vunpack.c.h.b16 %v1212
    %v1407 = vunpack.c.l.b16 %v1213
    %v1408 = vunpack.c.h.b16 %v1213
    %v1409 = vunpack.c.l.b16 %v1214
    %v1410 = vunpack.c.l.b16 %v1215
    %v1411 = vunpack.c.h.b16 %v1215
    %v1412 = vunpack.c.l.b16 %v1216
    %v1413 = vunpack.c.h.b16 %v1216
    %v1414 = vunpack.c.l.b16 %v1217
    %v1415 = vunpack.c.h.b16 %v1217
    %v1416 = vunpack.c.l.b16 %v1218
    %v1417 = vunpack.c.l.b16 %v1219
    %v1418 = vunpack.c.h.b16 %v1219
    %v1419 = vunpack.c.l.b16 %v1220
    %v1420 = vunpack.c.h.b16 %v1220
    %v1421 = vunpack.c.l.b16 %v1221
    %v1422 = vunpack.c.h.b16 %v1221
    %v1423 = vunpack.c.l.b16 %v1222
    %v1424 = vunpack.c.l.b16 %v1223
    %v1425 = vunpack.c.h.b16 %v1223
    %v1426 = vunpack.c.l.b16 %v1224
    %v1427 = vunpack.c.h.b16 %v1224
    %v1428 = vunpack.c.l.b16 %v1225
    %v1429 = vunpack.c.h.b16 %v1225
    %v1430 = vunpack.c.l.b16 %v1226
    %v1431 = vunpack.c.l.b16 %v1227
    %v1432 = vunpack.c.h.b16 %v1227
    %v1433 = vunpack.c.l.b16 %v1228
    %v1434 = vunpack.c.h.b16 %v1228
    %v1435 = vunpack.c.l.b16 %v1229
    %v1436 = vunpack.c.h.b16 %v1229
    %v1437 = vunpack.c.l.b16 %v1230
    %v1438 = vunpack.c.l.b16 %v1231
    %v1439 = vunpack.c.h.b16 %v1231
    %v1440 = vunpack.c.l.b16 %v1232
    %v1441 = vunpack.c.h.b16 %v1232
    %v1442 = vunpack.c.l.b16 %v1233
    %v1443 = vunpack.c.h.b16 %v1233
    %v1444 = vunpack.c.l.b16 %v1234
    %v1445 = vunpack.c.l.b16 %v1235
    %v1446 = vunpack.c.h.b16 %v1235
    %v1447 = vunpack.c.l.b16 %v1236
    %v1448 = vunpack.c.h.b16 %v1236
    %v1449 = vunpack.c.l.b16 %v1237
    %v1450 = vunpack.c.h.b16 %v1237
    %v1451 = vunpack.c.l.b16 %v1238
    %v1452 = vpack.c.b16 %v1347, %v1340
    %v1453 = vpack.c.b16 %v1348, %v1341
    %v1454 = vpack.c.b16 %v1349, %v1342
    %v1455 = vpack.c.b16 %v1350, %v1343
    %v1456 = vpack.c.b16 %v1351, %v1344
    %v1457 = vpack.c.b16 %v1352, %v1345
    %v1458 = vpack.c.b16 %v1353, %v1346
    %v1459 = vpack.c.b16 %v1361, %v1354
    %v1460 = vpack.c.b16 %v1362, %v1355
    %v1461 = vpack.c.b16 %v1363, %v1356
    %v1462 = vpack.c.b16 %v1364, %v1357
    %v1463 = vpack.c.b16 %v1365, %v1358
    %v1464 = vpack.c.b16 %v1366, %v1359
    %v1465 = vpack.c.b16 %v1367, %v1360
    %v1466 = vpack.c.b16 %v1375, %v1368
    %v1467 = vpack.c.b16 %v1376, %v1369
    %v1468 = vpack.c.b16 %v1377, %v1370
    %v1469 = vpack.c.b16 %v1378, %v1371
    %v1470 = vpack.c.b16 %v1379, %v1372
    %v1471 = vpack.c.b16 %v1380, %v1373
    %v1472 = vpack.c.b16 %v1381, %v1374
    %v1473 = vpack.c.b16 %v1389, %v1382
    %v1474 = vpack.c.b16 %v1390, %v1383
    %v1475 = vpack.c.b16 %v1391, %v1384
    %v1476 = vpack.c.b16 %v1392, %v1385
    %v1477 = vpack.c.b16 %v1393, %v1386
    %v1478 = vpack.c.b16 %v1394, %v1387
    %v1479 = vpack.c.b16 %v1395, %v1388
    %v1480 = vpack.c.b16 %v1403, %v1396
    %v1481 = vpack.c.b16 %v1404, %v1397
    %v1482 = vpack.c.b16 %v1405, %v1398
    %v1483 = vpack.c.b16 %v1406, %v1399
    %v1484 = vpack.c.b16 %v1407, %v1400
    %v1485 = vpack.c.b16 %v1408, %v1401
    %v1486 = vpack.c.b16 %v1409, %v1402
    %v1487 = vpack.c.b16 %v1417, %v1410
    %v1488 = vpack.c.b16 %v1418, %v1411
    %v1489 = vpack.c.b16 %v1419, %v1412
    %v1490 = vpack.c.b16 %v1420, %v1413
    %v1491 = vpack.c.b16 %v1421, %v1414
    %v1492 = vpack.c.b16 %v1422, %v1415
    %v1493 = vpack.c.b16 %v1423, %v1416
    %v1494 = vpack.c.b16 %v1431, %v1424
    %v1495 = vpack.c.b16 %v1432, %v1425
    %v1496 = vpack.c.b16 %v1433, %v1426
    %v1497 = vpack.c.b16 %v1434, %v1427
    %v1498 = vpack.c.b16 %v1435, %v1428
    %v1499 = vpack.c.b16 %v1436, %v1429
    %v1500 = vpack.c.b16 %v1437, %v1430
    %v1501 = vpack.c.b16 %v1445, %v1438
    %v1502 = vpack.c.b16 %v1446, %v1439
    %v1503 = vpack.c.b16 %v1447, %v1440
    %v1504 = vpack.c.b16 %v1448, %v1441
    %v1505 = vpack.c.b16 %v1449, %v1442
    %v1506 = vpack.c.b16 %v1450, %v1443
    %v1507 = vpack.c.b16 %v1451, %v1444
    %1564 = vmatprep.subr.bf16.mxu0 %v1502
    %1565 = vmatpush1.bf16.msra.mxu0 %v1501
    %1566 = vmatprep.subr.bf16.mxu0 %v1495
    %1567 = vmatpush1.bf16.msra.mxu0 %v1494
    %1568 = vmatprep.subr.bf16.mxu0 %v1488
    %1569 = vmatpush1.bf16.msra.mxu0 %v1487
    %1570 = vmatprep.subr.bf16.mxu0 %v1481
    %1571 = vmatpush1.bf16.msra.mxu0 %v1480
    %1572 = vmatprep.subr.bf16.mxu0 %v1474
    %1573 = vmatpush1.bf16.msra.mxu0 %v1473
    %1574 = vmatprep.subr.bf16.mxu0 %v1467
    %1575 = vmatpush1.bf16.msra.mxu0 %v1466
    %1576 = vmatprep.subr.bf16.mxu0 %v1460
    %1577 = vmatpush1.bf16.msra.mxu0 %v1459
    %1578 = vmatprep.subr.bf16.mxu0 %v1453
    %1579 = vmatpush1.bf16.msra.mxu0 %v1452
    %1580 = vmatprep.subr.bf16.mxu0 0
    %1581 = vmatpush2.bf16.msra.mxu0 0
    %1582 = vmatprep.subr.bf16.mxu0 0
    %1583 = vmatpush2.bf16.msra.mxu0 0
    %1584 = vmatprep.subr.bf16.mxu0 0
    %1585 = vmatpush2.bf16.msra.mxu0 0
    %1586 = vmatprep.subr.bf16.mxu0 0
    %1587 = vmatpush2.bf16.msra.mxu0 0
    %1588 = vmatprep.subr.bf16.mxu0 0
    %1589 = vmatpush2.bf16.msra.mxu0 0
    %1590 = vmatprep.subr.bf16.mxu0 0
    %1591 = vmatpush2.bf16.msra.mxu0 0
    %1592 = vmatprep.subr.bf16.mxu0 0
    %1593 = vmatpush2.bf16.msra.mxu0 0
    %1594 = vmatprep.subr.bf16.mxu0 0
    %1595 = vmatpush2.bf16.msra.mxu0 0
    %1596 = vmatprep.mubr.bf16.mxu0 0
    %1597 = vmatmul.mubr.bf16.gmra.mxu0 %v1174
    %v1598 = vpop.f32.mrf.mxu0
    %v1599 = vadd.f32 %v1244, %v1598
    %v1600 = vpop.f32.mrf.mxu0
    %v1601 = vadd.f32 %v1248, %v1600
    %v1602 = vpop.f32.mrf.mxu0
    %v1603 = vpop.f32.mrf.mxu0
    %1604 = vdwg.mxu0
    %1605 = vmatprep.subr.bf16.mxu0 %v1504
    %1606 = vmatpush1.bf16.msra.mxu0 %v1503
    %1607 = vmatprep.subr.bf16.mxu0 %v1497
    %1608 = vmatpush1.bf16.msra.mxu0 %v1496
    %1609 = vmatprep.subr.bf16.mxu0 %v1490
    %1610 = vmatpush1.bf16.msra.mxu0 %v1489
    %1611 = vmatprep.subr.bf16.mxu0 %v1483
    %1612 = vmatpush1.bf16.msra.mxu0 %v1482
    %1613 = vmatprep.subr.bf16.mxu0 %v1476
    %1614 = vmatpush1.bf16.msra.mxu0 %v1475
    %1615 = vmatprep.subr.bf16.mxu0 %v1469
    %1616 = vmatpush1.bf16.msra.mxu0 %v1468
    %1617 = vmatprep.subr.bf16.mxu0 %v1462
    %1618 = vmatpush1.bf16.msra.mxu0 %v1461
    %1619 = vmatprep.subr.bf16.mxu0 %v1455
    %1620 = vmatpush1.bf16.msra.mxu0 %v1454
    %1621 = vmatprep.subr.bf16.mxu0 0
    %1622 = vmatpush2.bf16.msra.mxu0 0
    %1623 = vmatprep.subr.bf16.mxu0 0
    %1624 = vmatpush2.bf16.msra.mxu0 0
    %1625 = vmatprep.subr.bf16.mxu0 0
    %1626 = vmatpush2.bf16.msra.mxu0 0
    %1627 = vmatprep.subr.bf16.mxu0 0
    %1628 = vmatpush2.bf16.msra.mxu0 0
    %1629 = vmatprep.subr.bf16.mxu0 0
    %1630 = vmatpush2.bf16.msra.mxu0 0
    %1631 = vmatprep.subr.bf16.mxu0 0
    %1632 = vmatpush2.bf16.msra.mxu0 0
    %1633 = vmatprep.subr.bf16.mxu0 0
    %1634 = vmatpush2.bf16.msra.mxu0 0
    %1635 = vmatprep.subr.bf16.mxu0 0
    %1636 = vmatpush2.bf16.msra.mxu0 0
    %1637 = vmatprep.mubr.bf16.mxu0 0
    %1638 = vmatmul.mubr.bf16.gmra.mxu0 %v1174
    %v1639 = vpop.f32.mrf.mxu0
    %v1640 = vadd.f32 %v1252, %v1639
    %v1641 = vpop.f32.mrf.mxu0
    %v1642 = vadd.f32 %v1256, %v1641
    %v1643 = vpop.f32.mrf.mxu0
    %v1644 = vpop.f32.mrf.mxu0
    %1645 = vdwg.mxu0
    %1646 = vmatprep.subr.bf16.mxu0 %v1506
    %1647 = vmatpush1.bf16.msra.mxu0 %v1505
    %1648 = vmatprep.subr.bf16.mxu0 %v1499
    %1649 = vmatpush1.bf16.msra.mxu0 %v1498
    %1650 = vmatprep.subr.bf16.mxu0 %v1492
    %1651 = vmatpush1.bf16.msra.mxu0 %v1491
    %1652 = vmatprep.subr.bf16.mxu0 %v1485
    %1653 = vmatpush1.bf16.msra.mxu0 %v1484
    %1654 = vmatprep.subr.bf16.mxu0 %v1478
    %1655 = vmatpush1.bf16.msra.mxu0 %v1477
    %1656 = vmatprep.subr.bf16.mxu0 %v1471
    %1657 = vmatpush1.bf16.msra.mxu0 %v1470
    %1658 = vmatprep.subr.bf16.mxu0 %v1464
    %1659 = vmatpush1.bf16.msra.mxu0 %v1463
    %1660 = vmatprep.subr.bf16.mxu0 %v1457
    %1661 = vmatpush1.bf16.msra.mxu0 %v1456
    %1662 = vmatprep.subr.bf16.mxu0 0
    %1663 = vmatpush2.bf16.msra.mxu0 0
    %1664 = vmatprep.subr.bf16.mxu0 0
    %1665 = vmatpush2.bf16.msra.mxu0 0
    %1666 = vmatprep.subr.bf16.mxu0 0
    %1667 = vmatpush2.bf16.msra.mxu0 0
    %1668 = vmatprep.subr.bf16.mxu0 0
    %1669 = vmatpush2.bf16.msra.mxu0 0
    %1670 = vmatprep.subr.bf16.mxu0 0
    %1671 = vmatpush2.bf16.msra.mxu0 0
    %1672 = vmatprep.subr.bf16.mxu0 0
    %1673 = vmatpush2.bf16.msra.mxu0 0
    %1674 = vmatprep.subr.bf16.mxu0 0
    %1675 = vmatpush2.bf16.msra.mxu0 0
    %1676 = vmatprep.subr.bf16.mxu0 0
    %1677 = vmatpush2.bf16.msra.mxu0 0
    %1678 = vmatprep.mubr.bf16.mxu0 0
    %1679 = vmatmul.mubr.bf16.gmra.mxu0 %v1174
    %v1680 = vpop.f32.mrf.mxu0
    %v1681 = vadd.f32 %v1260, %v1680
    %v1682 = vpop.f32.mrf.mxu0
    %v1683 = vadd.f32 %v1264, %v1682
    %v1684 = vpop.f32.mrf.mxu0
    %v1685 = vpop.f32.mrf.mxu0
    %1686 = vdwg.mxu0
    %1687 = vmatprep.subr.bf16.mxu0 0
    %1688 = vmatpush1.bf16.msra.mxu0 %v1507
    %1689 = vmatprep.subr.bf16.mxu0 0
    %1690 = vmatpush1.bf16.msra.mxu0 %v1500
    %1691 = vmatprep.subr.bf16.mxu0 0
    %1692 = vmatpush1.bf16.msra.mxu0 %v1493
    %1693 = vmatprep.subr.bf16.mxu0 0
    %1694 = vmatpush1.bf16.msra.mxu0 %v1486
    %1695 = vmatprep.subr.bf16.mxu0 0
    %1696 = vmatpush1.bf16.msra.mxu0 %v1479
    %1697 = vmatprep.subr.bf16.mxu0 0
    %1698 = vmatpush1.bf16.msra.mxu0 %v1472
    %1699 = vmatprep.subr.bf16.mxu0 0
    %1700 = vmatpush1.bf16.msra.mxu0 %v1465
    %1701 = vmatprep.subr.bf16.mxu0 0
    %1702 = vmatpush1.bf16.msra.mxu0 %v1458
    %1703 = vmatprep.subr.bf16.mxu0 0
    %1704 = vmatpush2.bf16.msra.mxu0 0
    %1705 = vmatprep.subr.bf16.mxu0 0
    %1706 = vmatpush2.bf16.msra.mxu0 0
    %1707 = vmatprep.subr.bf16.mxu0 0
    %1708 = vmatpush2.bf16.msra.mxu0 0
    %1709 = vmatprep.subr.bf16.mxu0 0
    %1710 = vmatpush2.bf16.msra.mxu0 0
    %1711 = vmatprep.subr.bf16.mxu0 0
    %1712 = vmatpush2.bf16.msra.mxu0 0
    %1713 = vmatprep.subr.bf16.mxu0 0
    %1714 = vmatpush2.bf16.msra.mxu0 0
    %1715 = vmatprep.subr.bf16.mxu0 0
    %1716 = vmatpush2.bf16.msra.mxu0 0
    %1717 = vmatprep.subr.bf16.mxu0 0
    %1718 = vmatpush2.bf16.msra.mxu0 0
    %1719 = vmatprep.mubr.bf16.mxu0 0
    %1720 = vmatmul.mubr.bf16.gmra.mxu0 %v1174
    %v1721 = vpop.f32.mrf.mxu0
    %v1722 = vadd.f32 %v1268, %v1721
    %v1723 = vpop.f32.mrf.mxu0
    %v1724 = vpop.f32.mrf.mxu0
    %v1725 = vpop.f32.mrf.mxu0
    %1726 = vdwg.mxu0
    %v1727 = vmax.f32 %v1599, 0.0
    %v1728 = vmax.f32 %v1601, 0.0
    %v1729 = vmax.f32 %v1640, 0.0
    %v1730 = vmax.f32 %v1642, 0.0
    %v1731 = vmax.f32 %v1681, 0.0
    %v1732 = vmax.f32 %v1683, 0.0
    %v1733 = vmax.f32 %v1722, 0.0
    %v1734 = vpack.c.bf16 %v1727, %v1727
    %v1735 = vpack.c.bf16 %v1728, %v1728
    %v1736 = vpack.c.bf16 %v1729, %v1729
    %v1737 = vpack.c.bf16 %v1730, %v1730
    %v1738 = vpack.c.bf16 %v1731, %v1731
    %v1739 = vpack.c.bf16 %v1732, %v1732
    %v1740 = vpack.c.bf16 %v1733, %v1733
    %v1741 = vld [vmem:[#allocation7] sm:$0xff]
    %v1742 = vld [vmem:[#allocation7 + $0x8] sm:$0xff]
    %v1743 = vld [vmem:[#allocation7 + $0x10] sm:$0xff]
    %v1744 = vld [vmem:[#allocation7 + $0x18] sm:$0xff]
    %v1745 = vld [vmem:[#allocation7 + $0x20] sm:$0xff]
    %v1746 = vld [vmem:[#allocation7 + $0x28] sm:$0xff]
    %v1747 = vld [vmem:[#allocation7 + $0x30] sm:$0xff]
    %v1748 = vld [vmem:[#allocation7 + $0x38] sm:$0xff]
    %v1749 = vld [vmem:[#allocation7 + $0x40] sm:$0xff]
    %v1750 = vld [vmem:[#allocation7 + $0x48] sm:$0xff]
    %v1751 = vld [vmem:[#allocation7 + $0x50] sm:$0xff]
    %v1752 = vld [vmem:[#allocation7 + $0x58] sm:$0xff]
    %v1753 = vld [vmem:[#allocation7 + $0x60] sm:$0xff]
    %v1754 = vld [vmem:[#allocation7 + $0x68] sm:$0xff]
    %v1755 = vld [vmem:[#allocation7 + $0x70] sm:$0xff]
    %v1756 = vld [vmem:[#allocation7 + $0x78] sm:$0xff]
    %v1757 = vld [vmem:[#allocation7 + $0x80] sm:$0xff]
    %v1758 = vld [vmem:[#allocation7 + $0x88] sm:$0xff]
    %v1759 = vld [vmem:[#allocation7 + $0x90] sm:$0xff]
    %v1760 = vld [vmem:[#allocation7 + $0x98] sm:$0xff]
    %v1761 = vld [vmem:[#allocation7 + $0xa0] sm:$0xff]
    %v1762 = vld [vmem:[#allocation7 + $0xa8] sm:$0xff]
    %v1763 = vld [vmem:[#allocation7 + $0xb0] sm:$0xff]
    %v1764 = vld [vmem:[#allocation7 + $0xb8] sm:$0xff]
    %v1765 = vld [vmem:[#allocation7 + $0xc0] sm:$0xff]
    %v1766 = vld [vmem:[#allocation7 + $0xc8] sm:$0xff]
    %v1767 = vld [vmem:[#allocation7 + $0xd0] sm:$0xff]
    %v1768 = vld [vmem:[#allocation7 + $0xd8] sm:$0xff]
    %v1769 = vld [vmem:[#allocation7 + $0xe0] sm:$0xff]
    %v1770 = vld [vmem:[#allocation7 + $0xe8] sm:$0xff]
    %v1771 = vld [vmem:[#allocation7 + $0xf0] sm:$0xff]
    %v1772 = vld [vmem:[#allocation7 + $0xf8] sm:$0xff]
    %v1773 = vld [vmem:[#allocation7 + $0x100] sm:$0xff]
    %v1774 = vld [vmem:[#allocation7 + $0x108] sm:$0xff]
    %v1775 = vld [vmem:[#allocation7 + $0x110] sm:$0xff]
    %v1776 = vld [vmem:[#allocation7 + $0x118] sm:$0xff]
    %v1777 = vld [vmem:[#allocation7 + $0x120] sm:$0xff]
    %v1778 = vld [vmem:[#allocation7 + $0x128] sm:$0xff]
    %v1779 = vld [vmem:[#allocation7 + $0x130] sm:$0xff]
    %v1780 = vld [vmem:[#allocation7 + $0x138] sm:$0xff]
    %v1781 = vld [vmem:[#allocation7 + $0x140] sm:$0xff]
    %v1782 = vld [vmem:[#allocation7 + $0x148] sm:$0xff]
    %v1783 = vld [vmem:[#allocation7 + $0x150] sm:$0xff]
    %v1784 = vld [vmem:[#allocation7 + $0x158] sm:$0xff]
    %v1785 = vld [vmem:[#allocation7 + $0x160] sm:$0xff]
    %v1786 = vld [vmem:[#allocation7 + $0x168] sm:$0xff]
    %v1787 = vld [vmem:[#allocation7 + $0x170] sm:$0xff]
    %v1788 = vld [vmem:[#allocation7 + $0x178] sm:$0xff]
    %v1789 = vld [vmem:[#allocation7 + $0x180] sm:$0xff]
    %v1790 = vld [vmem:[#allocation7 + $0x188] sm:$0xff]
    %v1791 = vld [vmem:[#allocation7 + $0x190] sm:$0xff]
    %v1792 = vld [vmem:[#allocation7 + $0x198] sm:$0xff]
    %v1793 = vld [vmem:[#allocation7 + $0x1a0] sm:$0xff]
    %v1794 = vld [vmem:[#allocation7 + $0x1a8] sm:$0xff]
    %v1795 = vld [vmem:[#allocation7 + $0x1b0] sm:$0xff]
    %v1796 = vld [vmem:[#allocation7 + $0x1b8] sm:$0xff]
    %v1797 = vld [vmem:[#allocation7 + $0x1c0] sm:$0xff]
    %v1798 = vld [vmem:[#allocation7 + $0x1c8] sm:$0xff]
    %v1799 = vld [vmem:[#allocation7 + $0x1d0] sm:$0xff]
    %v1800 = vld [vmem:[#allocation7 + $0x1d8] sm:$0xff]
    %v1801 = vld [vmem:[#allocation7 + $0x1e0] sm:$0xff]
    %v1802 = vld [vmem:[#allocation7 + $0x1e8] sm:$0xff]
    %v1803 = vld [vmem:[#allocation7 + $0x1f0] sm:$0xff]
    %v1804 = vld [vmem:[#allocation7 + $0x1f8] sm:$0xff]
    %v1805 = vld [vmem:[#allocation7 + $0x200] sm:$0xff]
    %v1806 = vld [vmem:[#allocation7 + $0x208] sm:$0xff]
    %v1807 = vld [vmem:[#allocation7 + $0x210] sm:$0xff]
    %v1808 = vld [vmem:[#allocation7 + $0x218] sm:$0xff]
    %v1809 = vld [vmem:[#allocation7 + $0x220] sm:$0xff]
    %v1810 = vld [vmem:[#allocation7 + $0x228] sm:$0xff]
    %v1811 = vld [vmem:[#allocation7 + $0x230] sm:$0xff]
    %v1812 = vld [vmem:[#allocation7 + $0x238] sm:$0xff]
    %v1813 = vld [vmem:[#allocation7 + $0x240] sm:$0xff]
    %v1814 = vld [vmem:[#allocation7 + $0x248] sm:$0xff]
    %v1815 = vld [vmem:[#allocation7 + $0x250] sm:$0xff]
    %v1816 = vld [vmem:[#allocation7 + $0x258] sm:$0xff]
    %v1817 = vld [vmem:[#allocation7 + $0x260] sm:$0xff]
    %v1818 = vld [vmem:[#allocation7 + $0x268] sm:$0xff]
    %v1819 = vld [vmem:[#allocation7 + $0x270] sm:$0xff]
    %v1820 = vld [vmem:[#allocation7 + $0x278] sm:$0xff]
    %v1821 = vld [vmem:[#allocation7 + $0x280] sm:$0xff]
    %v1822 = vld [vmem:[#allocation7 + $0x288] sm:$0xff]
    %v1823 = vld [vmem:[#allocation7 + $0x290] sm:$0xff]
    %v1824 = vld [vmem:[#allocation7 + $0x298] sm:$0xff]
    %v1825 = vld [vmem:[#allocation7 + $0x2a0] sm:$0xff]
    %v1826 = vld [vmem:[#allocation7 + $0x2a8] sm:$0xff]
    %v1827 = vld [vmem:[#allocation7 + $0x2b0] sm:$0xff]
    %v1828 = vld [vmem:[#allocation7 + $0x2b8] sm:$0xff]
    %v1829 = vld [vmem:[#allocation7 + $0x2c0] sm:$0xff]
    %v1830 = vld [vmem:[#allocation7 + $0x2c8] sm:$0xff]
    %v1831 = vld [vmem:[#allocation7 + $0x2d0] sm:$0xff]
    %v1832 = vld [vmem:[#allocation7 + $0x2d8] sm:$0xff]
    %v1833 = vld [vmem:[#allocation7 + $0x2e0] sm:$0xff]
    %v1834 = vld [vmem:[#allocation7 + $0x2e8] sm:$0xff]
    %v1835 = vld [vmem:[#allocation7 + $0x2f0] sm:$0xff]
    %v1836 = vld [vmem:[#allocation7 + $0x2f8] sm:$0xff]
    %v1837 = vld [vmem:[#allocation7 + $0x300] sm:$0xff]
    %v1838 = vld [vmem:[#allocation7 + $0x308] sm:$0xff]
    %v1839 = vld [vmem:[#allocation7 + $0x310] sm:$0xff]
    %v1840 = vld [vmem:[#allocation7 + $0x318] sm:$0xff]
    %v1841 = vld [vmem:[#allocation7 + $0x320] sm:$0xff]
    %v1842 = vld [vmem:[#allocation7 + $0x328] sm:$0xff]
    %v1843 = vld [vmem:[#allocation7 + $0x330] sm:$0xff]
    %v1844 = vld [vmem:[#allocation7 + $0x338] sm:$0xff]
    %v1845 = vld [vmem:[#allocation7 + $0x340] sm:$0xff]
    %v1846 = vld [vmem:[#allocation7 + $0x348] sm:$0xff]
    %v1847 = vld [vmem:[#allocation7 + $0x350] sm:$0xff]
    %v1848 = vld [vmem:[#allocation7 + $0x358] sm:$0xff]
    %v1849 = vld [vmem:[#allocation7 + $0x360] sm:$0xff]
    %v1850 = vld [vmem:[#allocation7 + $0x368] sm:$0xff]
    %v1851 = vld [vmem:[#allocation7 + $0x370] sm:$0xff]
    %v1852 = vld [vmem:[#allocation7 + $0x378] sm:$0xff]
    %v1853 = vld [vmem:[%s13] sm:$0x3]
    %v1855 = vlaneseq
    %v1856 = vshrl.u32 %v1855, 7
    %v1857 = vsub.s32 0, %v1856
    %v1858 = vrot.slane %v1853, %v1857
    %v1859 = vlaneseq
    %v1860 = vshrl.u32 %v1859, 7
    %v1861 = vsub.s32 1, %v1860
    %v1862 = vrot.slane %v1853, %v1861
    %v1977 = vunpack.c.l.b16 %v1741
    %v1978 = vunpack.c.h.b16 %v1741
    %v1979 = vunpack.c.l.b16 %v1742
    %v1980 = vunpack.c.h.b16 %v1742
    %v1981 = vunpack.c.l.b16 %v1743
    %v1982 = vunpack.c.h.b16 %v1743
    %v1983 = vunpack.c.l.b16 %v1744
    %v1984 = vunpack.c.h.b16 %v1744
    %v1985 = vunpack.c.l.b16 %v1745
    %v1986 = vunpack.c.h.b16 %v1745
    %v1987 = vunpack.c.l.b16 %v1746
    %v1988 = vunpack.c.h.b16 %v1746
    %v1989 = vunpack.c.l.b16 %v1747
    %v1990 = vunpack.c.h.b16 %v1747
    %v1991 = vunpack.c.l.b16 %v1748
    %v1992 = vunpack.c.h.b16 %v1748
    %v1993 = vunpack.c.l.b16 %v1749
    %v1994 = vunpack.c.h.b16 %v1749
    %v1995 = vunpack.c.l.b16 %v1750
    %v1996 = vunpack.c.h.b16 %v1750
    %v1997 = vunpack.c.l.b16 %v1751
    %v1998 = vunpack.c.h.b16 %v1751
    %v1999 = vunpack.c.l.b16 %v1752
    %v2000 = vunpack.c.h.b16 %v1752
    %v2001 = vunpack.c.l.b16 %v1753
    %v2002 = vunpack.c.h.b16 %v1753
    %v2003 = vunpack.c.l.b16 %v1754
    %v2004 = vunpack.c.h.b16 %v1754
    %v2005 = vunpack.c.l.b16 %v1755
    %v2006 = vunpack.c.h.b16 %v1755
    %v2007 = vunpack.c.l.b16 %v1756
    %v2008 = vunpack.c.h.b16 %v1756
    %v2009 = vunpack.c.l.b16 %v1757
    %v2010 = vunpack.c.h.b16 %v1757
    %v2011 = vunpack.c.l.b16 %v1758
    %v2012 = vunpack.c.h.b16 %v1758
    %v2013 = vunpack.c.l.b16 %v1759
    %v2014 = vunpack.c.h.b16 %v1759
    %v2015 = vunpack.c.l.b16 %v1760
    %v2016 = vunpack.c.h.b16 %v1760
    %v2017 = vunpack.c.l.b16 %v1761
    %v2018 = vunpack.c.h.b16 %v1761
    %v2019 = vunpack.c.l.b16 %v1762
    %v2020 = vunpack.c.h.b16 %v1762
    %v2021 = vunpack.c.l.b16 %v1763
    %v2022 = vunpack.c.h.b16 %v1763
    %v2023 = vunpack.c.l.b16 %v1764
    %v2024 = vunpack.c.h.b16 %v1764
    %v2025 = vunpack.c.l.b16 %v1765
    %v2026 = vunpack.c.h.b16 %v1765
    %v2027 = vunpack.c.l.b16 %v1766
    %v2028 = vunpack.c.h.b16 %v1766
    %v2029 = vunpack.c.l.b16 %v1767
    %v2030 = vunpack.c.h.b16 %v1767
    %v2031 = vunpack.c.l.b16 %v1768
    %v2032 = vunpack.c.h.b16 %v1768
    %v2033 = vunpack.c.l.b16 %v1769
    %v2034 = vunpack.c.h.b16 %v1769
    %v2035 = vunpack.c.l.b16 %v1770
    %v2036 = vunpack.c.h.b16 %v1770
    %v2037 = vunpack.c.l.b16 %v1771
    %v2038 = vunpack.c.h.b16 %v1771
    %v2039 = vunpack.c.l.b16 %v1772
    %v2040 = vunpack.c.h.b16 %v1772
    %v2041 = vunpack.c.l.b16 %v1773
    %v2042 = vunpack.c.h.b16 %v1773
    %v2043 = vunpack.c.l.b16 %v1774
    %v2044 = vunpack.c.h.b16 %v1774
    %v2045 = vunpack.c.l.b16 %v1775
    %v2046 = vunpack.c.h.b16 %v1775
    %v2047 = vunpack.c.l.b16 %v1776
    %v2048 = vunpack.c.h.b16 %v1776
    %v2049 = vunpack.c.l.b16 %v1777
    %v2050 = vunpack.c.h.b16 %v1777
    %v2051 = vunpack.c.l.b16 %v1778
    %v2052 = vunpack.c.h.b16 %v1778
    %v2053 = vunpack.c.l.b16 %v1779
    %v2054 = vunpack.c.h.b16 %v1779
    %v2055 = vunpack.c.l.b16 %v1780
    %v2056 = vunpack.c.h.b16 %v1780
    %v2057 = vunpack.c.l.b16 %v1781
    %v2058 = vunpack.c.h.b16 %v1781
    %v2059 = vunpack.c.l.b16 %v1782
    %v2060 = vunpack.c.h.b16 %v1782
    %v2061 = vunpack.c.l.b16 %v1783
    %v2062 = vunpack.c.h.b16 %v1783
    %v2063 = vunpack.c.l.b16 %v1784
    %v2064 = vunpack.c.h.b16 %v1784
    %v2065 = vunpack.c.l.b16 %v1785
    %v2066 = vunpack.c.h.b16 %v1785
    %v2067 = vunpack.c.l.b16 %v1786
    %v2068 = vunpack.c.h.b16 %v1786
    %v2069 = vunpack.c.l.b16 %v1787
    %v2070 = vunpack.c.h.b16 %v1787
    %v2071 = vunpack.c.l.b16 %v1788
    %v2072 = vunpack.c.h.b16 %v1788
    %v2073 = vunpack.c.l.b16 %v1789
    %v2074 = vunpack.c.h.b16 %v1789
    %v2075 = vunpack.c.l.b16 %v1790
    %v2076 = vunpack.c.h.b16 %v1790
    %v2077 = vunpack.c.l.b16 %v1791
    %v2078 = vunpack.c.h.b16 %v1791
    %v2079 = vunpack.c.l.b16 %v1792
    %v2080 = vunpack.c.h.b16 %v1792
    %v2081 = vunpack.c.l.b16 %v1793
    %v2082 = vunpack.c.h.b16 %v1793
    %v2083 = vunpack.c.l.b16 %v1794
    %v2084 = vunpack.c.h.b16 %v1794
    %v2085 = vunpack.c.l.b16 %v1795
    %v2086 = vunpack.c.h.b16 %v1795
    %v2087 = vunpack.c.l.b16 %v1796
    %v2088 = vunpack.c.h.b16 %v1796
    %v2089 = vunpack.c.l.b16 %v1797
    %v2090 = vunpack.c.h.b16 %v1797
    %v2091 = vunpack.c.l.b16 %v1798
    %v2092 = vunpack.c.h.b16 %v1798
    %v2093 = vunpack.c.l.b16 %v1799
    %v2094 = vunpack.c.h.b16 %v1799
    %v2095 = vunpack.c.l.b16 %v1800
    %v2096 = vunpack.c.h.b16 %v1800
    %v2097 = vunpack.c.l.b16 %v1801
    %v2098 = vunpack.c.h.b16 %v1801
    %v2099 = vunpack.c.l.b16 %v1802
    %v2100 = vunpack.c.h.b16 %v1802
    %v2101 = vunpack.c.l.b16 %v1803
    %v2102 = vunpack.c.h.b16 %v1803
    %v2103 = vunpack.c.l.b16 %v1804
    %v2104 = vunpack.c.h.b16 %v1804
    %v2105 = vunpack.c.l.b16 %v1805
    %v2106 = vunpack.c.h.b16 %v1805
    %v2107 = vunpack.c.l.b16 %v1806
    %v2108 = vunpack.c.h.b16 %v1806
    %v2109 = vunpack.c.l.b16 %v1807
    %v2110 = vunpack.c.h.b16 %v1807
    %v2111 = vunpack.c.l.b16 %v1808
    %v2112 = vunpack.c.h.b16 %v1808
    %v2113 = vunpack.c.l.b16 %v1809
    %v2114 = vunpack.c.h.b16 %v1809
    %v2115 = vunpack.c.l.b16 %v1810
    %v2116 = vunpack.c.h.b16 %v1810
    %v2117 = vunpack.c.l.b16 %v1811
    %v2118 = vunpack.c.h.b16 %v1811
    %v2119 = vunpack.c.l.b16 %v1812
    %v2120 = vunpack.c.h.b16 %v1812
    %v2121 = vunpack.c.l.b16 %v1813
    %v2122 = vunpack.c.h.b16 %v1813
    %v2123 = vunpack.c.l.b16 %v1814
    %v2124 = vunpack.c.h.b16 %v1814
    %v2125 = vunpack.c.l.b16 %v1815
    %v2126 = vunpack.c.h.b16 %v1815
    %v2127 = vunpack.c.l.b16 %v1816
    %v2128 = vunpack.c.h.b16 %v1816
    %v2129 = vunpack.c.l.b16 %v1817
    %v2130 = vunpack.c.h.b16 %v1817
    %v2131 = vunpack.c.l.b16 %v1818
    %v2132 = vunpack.c.h.b16 %v1818
    %v2133 = vunpack.c.l.b16 %v1819
    %v2134 = vunpack.c.h.b16 %v1819
    %v2135 = vunpack.c.l.b16 %v1820
    %v2136 = vunpack.c.h.b16 %v1820
    %v2137 = vunpack.c.l.b16 %v1821
    %v2138 = vunpack.c.h.b16 %v1821
    %v2139 = vunpack.c.l.b16 %v1822
    %v2140 = vunpack.c.h.b16 %v1822
    %v2141 = vunpack.c.l.b16 %v1823
    %v2142 = vunpack.c.h.b16 %v1823
    %v2143 = vunpack.c.l.b16 %v1824
    %v2144 = vunpack.c.h.b16 %v1824
    %v2145 = vunpack.c.l.b16 %v1825
    %v2146 = vunpack.c.h.b16 %v1825
    %v2147 = vunpack.c.l.b16 %v1826
    %v2148 = vunpack.c.h.b16 %v1826
    %v2149 = vunpack.c.l.b16 %v1827
    %v2150 = vunpack.c.h.b16 %v1827
    %v2151 = vunpack.c.l.b16 %v1828
    %v2152 = vunpack.c.h.b16 %v1828
    %v2153 = vunpack.c.l.b16 %v1829
    %v2154 = vunpack.c.h.b16 %v1829
    %v2155 = vunpack.c.l.b16 %v1830
    %v2156 = vunpack.c.h.b16 %v1830
    %v2157 = vunpack.c.l.b16 %v1831
    %v2158 = vunpack.c.h.b16 %v1831
    %v2159 = vunpack.c.l.b16 %v1832
    %v2160 = vunpack.c.h.b16 %v1832
    %v2161 = vunpack.c.l.b16 %v1833
    %v2162 = vunpack.c.h.b16 %v1833
    %v2163 = vunpack.c.l.b16 %v1834
    %v2164 = vunpack.c.h.b16 %v1834
    %v2165 = vunpack.c.l.b16 %v1835
    %v2166 = vunpack.c.h.b16 %v1835
    %v2167 = vunpack.c.l.b16 %v1836
    %v2168 = vunpack.c.h.b16 %v1836
    %v2169 = vunpack.c.l.b16 %v1837
    %v2170 = vunpack.c.h.b16 %v1837
    %v2171 = vunpack.c.l.b16 %v1838
    %v2172 = vunpack.c.h.b16 %v1838
    %v2173 = vunpack.c.l.b16 %v1839
    %v2174 = vunpack.c.h.b16 %v1839
    %v2175 = vunpack.c.l.b16 %v1840
    %v2176 = vunpack.c.h.b16 %v1840
    %v2177 = vunpack.c.l.b16 %v1841
    %v2178 = vunpack.c.h.b16 %v1841
    %v2179 = vunpack.c.l.b16 %v1842
    %v2180 = vunpack.c.h.b16 %v1842
    %v2181 = vunpack.c.l.b16 %v1843
    %v2182 = vunpack.c.h.b16 %v1843
    %v2183 = vunpack.c.l.b16 %v1844
    %v2184 = vunpack.c.h.b16 %v1844
    %v2185 = vunpack.c.l.b16 %v1845
    %v2186 = vunpack.c.h.b16 %v1845
    %v2187 = vunpack.c.l.b16 %v1846
    %v2188 = vunpack.c.h.b16 %v1846
    %v2189 = vunpack.c.l.b16 %v1847
    %v2190 = vunpack.c.h.b16 %v1847
    %v2191 = vunpack.c.l.b16 %v1848
    %v2192 = vunpack.c.h.b16 %v1848
    %v2193 = vunpack.c.l.b16 %v1849
    %v2194 = vunpack.c.h.b16 %v1849
    %v2195 = vunpack.c.l.b16 %v1850
    %v2196 = vunpack.c.h.b16 %v1850
    %v2197 = vunpack.c.l.b16 %v1851
    %v2198 = vunpack.c.h.b16 %v1851
    %v2199 = vunpack.c.l.b16 %v1852
    %v2200 = vunpack.c.h.b16 %v1852
    %v2201 = vpack.c.b16 %v1979, %v1977
    %v2202 = vpack.c.b16 %v1980, %v1978
    %v2203 = vpack.c.b16 %v1983, %v1981
    %v2204 = vpack.c.b16 %v1984, %v1982
    %v2205 = vpack.c.b16 %v1987, %v1985
    %v2206 = vpack.c.b16 %v1988, %v1986
    %v2207 = vpack.c.b16 %v1991, %v1989
    %v2208 = vpack.c.b16 %v1992, %v1990
    %v2209 = vpack.c.b16 %v1995, %v1993
    %v2210 = vpack.c.b16 %v1996, %v1994
    %v2211 = vpack.c.b16 %v1999, %v1997
    %v2212 = vpack.c.b16 %v2000, %v1998
    %v2213 = vpack.c.b16 %v2003, %v2001
    %v2214 = vpack.c.b16 %v2004, %v2002
    %v2215 = vpack.c.b16 %v2007, %v2005
    %v2216 = vpack.c.b16 %v2008, %v2006
    %v2217 = vpack.c.b16 %v2011, %v2009
    %v2218 = vpack.c.b16 %v2012, %v2010
    %v2219 = vpack.c.b16 %v2015, %v2013
    %v2220 = vpack.c.b16 %v2016, %v2014
    %v2221 = vpack.c.b16 %v2019, %v2017
    %v2222 = vpack.c.b16 %v2020, %v2018
    %v2223 = vpack.c.b16 %v2023, %v2021
    %v2224 = vpack.c.b16 %v2024, %v2022
    %v2225 = vpack.c.b16 %v2027, %v2025
    %v2226 = vpack.c.b16 %v2028, %v2026
    %v2227 = vpack.c.b16 %v2031, %v2029
    %v2228 = vpack.c.b16 %v2032, %v2030
    %v2229 = vpack.c.b16 %v2035, %v2033
    %v2230 = vpack.c.b16 %v2036, %v2034
    %v2231 = vpack.c.b16 %v2039, %v2037
    %v2232 = vpack.c.b16 %v2040, %v2038
    %v2233 = vpack.c.b16 %v2043, %v2041
    %v2234 = vpack.c.b16 %v2044, %v2042
    %v2235 = vpack.c.b16 %v2047, %v2045
    %v2236 = vpack.c.b16 %v2048, %v2046
    %v2237 = vpack.c.b16 %v2051, %v2049
    %v2238 = vpack.c.b16 %v2052, %v2050
    %v2239 = vpack.c.b16 %v2055, %v2053
    %v2240 = vpack.c.b16 %v2056, %v2054
    %v2241 = vpack.c.b16 %v2059, %v2057
    %v2242 = vpack.c.b16 %v2060, %v2058
    %v2243 = vpack.c.b16 %v2063, %v2061
    %v2244 = vpack.c.b16 %v2064, %v2062
    %v2245 = vpack.c.b16 %v2067, %v2065
    %v2246 = vpack.c.b16 %v2068, %v2066
    %v2247 = vpack.c.b16 %v2071, %v2069
    %v2248 = vpack.c.b16 %v2072, %v2070
    %v2249 = vpack.c.b16 %v2075, %v2073
    %v2250 = vpack.c.b16 %v2076, %v2074
    %v2251 = vpack.c.b16 %v2079, %v2077
    %v2252 = vpack.c.b16 %v2080, %v2078
    %v2253 = vpack.c.b16 %v2083, %v2081
    %v2254 = vpack.c.b16 %v2084, %v2082
    %v2255 = vpack.c.b16 %v2087, %v2085
    %v2256 = vpack.c.b16 %v2088, %v2086
    %v2257 = vpack.c.b16 %v2091, %v2089
    %v2258 = vpack.c.b16 %v2092, %v2090
    %v2259 = vpack.c.b16 %v2095, %v2093
    %v2260 = vpack.c.b16 %v2096, %v2094
    %v2261 = vpack.c.b16 %v2099, %v2097
    %v2262 = vpack.c.b16 %v2100, %v2098
    %v2263 = vpack.c.b16 %v2103, %v2101
    %v2264 = vpack.c.b16 %v2104, %v2102
    %v2265 = vpack.c.b16 %v2107, %v2105
    %v2266 = vpack.c.b16 %v2108, %v2106
    %v2267 = vpack.c.b16 %v2111, %v2109
    %v2268 = vpack.c.b16 %v2112, %v2110
    %v2269 = vpack.c.b16 %v2115, %v2113
    %v2270 = vpack.c.b16 %v2116, %v2114
    %v2271 = vpack.c.b16 %v2119, %v2117
    %v2272 = vpack.c.b16 %v2120, %v2118
    %v2273 = vpack.c.b16 %v2123, %v2121
    %v2274 = vpack.c.b16 %v2124, %v2122
    %v2275 = vpack.c.b16 %v2127, %v2125
    %v2276 = vpack.c.b16 %v2128, %v2126
    %v2277 = vpack.c.b16 %v2131, %v2129
    %v2278 = vpack.c.b16 %v2132, %v2130
    %v2279 = vpack.c.b16 %v2135, %v2133
    %v2280 = vpack.c.b16 %v2136, %v2134
    %v2281 = vpack.c.b16 %v2139, %v2137
    %v2282 = vpack.c.b16 %v2140, %v2138
    %v2283 = vpack.c.b16 %v2143, %v2141
    %v2284 = vpack.c.b16 %v2144, %v2142
    %v2285 = vpack.c.b16 %v2147, %v2145
    %v2286 = vpack.c.b16 %v2148, %v2146
    %v2287 = vpack.c.b16 %v2151, %v2149
    %v2288 = vpack.c.b16 %v2152, %v2150
    %v2289 = vpack.c.b16 %v2155, %v2153
    %v2290 = vpack.c.b16 %v2156, %v2154
    %v2291 = vpack.c.b16 %v2159, %v2157
    %v2292 = vpack.c.b16 %v2160, %v2158
    %v2293 = vpack.c.b16 %v2163, %v2161
    %v2294 = vpack.c.b16 %v2164, %v2162
    %v2295 = vpack.c.b16 %v2167, %v2165
    %v2296 = vpack.c.b16 %v2168, %v2166
    %v2297 = vpack.c.b16 %v2171, %v2169
    %v2298 = vpack.c.b16 %v2172, %v2170
    %v2299 = vpack.c.b16 %v2175, %v2173
    %v2300 = vpack.c.b16 %v2176, %v2174
    %v2301 = vpack.c.b16 %v2179, %v2177
    %v2302 = vpack.c.b16 %v2180, %v2178
    %v2303 = vpack.c.b16 %v2183, %v2181
    %v2304 = vpack.c.b16 %v2184, %v2182
    %v2305 = vpack.c.b16 %v2187, %v2185
    %v2306 = vpack.c.b16 %v2188, %v2186
    %v2307 = vpack.c.b16 %v2191, %v2189
    %v2308 = vpack.c.b16 %v2192, %v2190
    %v2309 = vpack.c.b16 %v2195, %v2193
    %v2310 = vpack.c.b16 %v2196, %v2194
    %v2311 = vpack.c.b16 %v2199, %v2197
    %v2312 = vpack.c.b16 %v2200, %v2198
    %2425 = vmatprep.subr.bf16.mxu0 %v2216
    %2426 = vmatpush1.bf16.msra.mxu0 %v2215
    %2427 = vmatprep.subr.bf16.mxu0 %v2214
    %2428 = vmatpush1.bf16.msra.mxu0 %v2213
    %2429 = vmatprep.subr.bf16.mxu0 %v2212
    %2430 = vmatpush1.bf16.msra.mxu0 %v2211
    %2431 = vmatprep.subr.bf16.mxu0 %v2210
    %2432 = vmatpush1.bf16.msra.mxu0 %v2209
    %2433 = vmatprep.subr.bf16.mxu0 %v2208
    %2434 = vmatpush1.bf16.msra.mxu0 %v2207
    %2435 = vmatprep.subr.bf16.mxu0 %v2206
    %2436 = vmatpush1.bf16.msra.mxu0 %v2205
    %2437 = vmatprep.subr.bf16.mxu0 %v2204
    %2438 = vmatpush1.bf16.msra.mxu0 %v2203
    %2439 = vmatprep.subr.bf16.mxu0 %v2202
    %2440 = vmatpush1.bf16.msra.mxu0 %v2201
    %2441 = vmatprep.subr.bf16.mxu0 %v2232
    %2442 = vmatpush2.bf16.msra.mxu0 %v2231
    %2443 = vmatprep.subr.bf16.mxu0 %v2230
    %2444 = vmatpush2.bf16.msra.mxu0 %v2229
    %2445 = vmatprep.subr.bf16.mxu0 %v2228
    %2446 = vmatpush2.bf16.msra.mxu0 %v2227
    %2447 = vmatprep.subr.bf16.mxu0 %v2226
    %2448 = vmatpush2.bf16.msra.mxu0 %v2225
    %2449 = vmatprep.subr.bf16.mxu0 %v2224
    %2450 = vmatpush2.bf16.msra.mxu0 %v2223
    %2451 = vmatprep.subr.bf16.mxu0 %v2222
    %2452 = vmatpush2.bf16.msra.mxu0 %v2221
    %2453 = vmatprep.subr.bf16.mxu0 %v2220
    %2454 = vmatpush2.bf16.msra.mxu0 %v2219
    %2455 = vmatprep.subr.bf16.mxu0 %v2218
    %2456 = vmatpush2.bf16.msra.mxu0 %v2217
    %2457 = vmatprep.mubr.bf16.mxu0 %v1735
    %2458 = vmatmul.mubr.bf16.gmra.mxu0 %v1734
    %v2459 = vpop.f32.mrf.mxu0
    %v2460 = vadd.f32 %v1858, %v2459
    %v2461 = vpop.f32.mrf.mxu0
    %v2462 = vadd.f32 %v1862, %v2461
    %v2463 = vpop.f32.mrf.mxu0
    %v2464 = vpop.f32.mrf.mxu0
    %2465 = vdwg.mxu0
    %2466 = vmatprep.subr.bf16.mxu0 %v2248
    %2467 = vmatpush1.bf16.msra.mxu0 %v2247
    %2468 = vmatprep.subr.bf16.mxu0 %v2246
    %2469 = vmatpush1.bf16.msra.mxu0 %v2245
    %2470 = vmatprep.subr.bf16.mxu0 %v2244
    %2471 = vmatpush1.bf16.msra.mxu0 %v2243
    %2472 = vmatprep.subr.bf16.mxu0 %v2242
    %2473 = vmatpush1.bf16.msra.mxu0 %v2241
    %2474 = vmatprep.subr.bf16.mxu0 %v2240
    %2475 = vmatpush1.bf16.msra.mxu0 %v2239
    %2476 = vmatprep.subr.bf16.mxu0 %v2238
    %2477 = vmatpush1.bf16.msra.mxu0 %v2237
    %2478 = vmatprep.subr.bf16.mxu0 %v2236
    %2479 = vmatpush1.bf16.msra.mxu0 %v2235
    %2480 = vmatprep.subr.bf16.mxu0 %v2234
    %2481 = vmatpush1.bf16.msra.mxu0 %v2233
    %2482 = vmatprep.subr.bf16.mxu0 %v2264
    %2483 = vmatpush2.bf16.msra.mxu0 %v2263
    %2484 = vmatprep.subr.bf16.mxu0 %v2262
    %2485 = vmatpush2.bf16.msra.mxu0 %v2261
    %2486 = vmatprep.subr.bf16.mxu0 %v2260
    %2487 = vmatpush2.bf16.msra.mxu0 %v2259
    %2488 = vmatprep.subr.bf16.mxu0 %v2258
    %2489 = vmatpush2.bf16.msra.mxu0 %v2257
    %2490 = vmatprep.subr.bf16.mxu0 %v2256
    %2491 = vmatpush2.bf16.msra.mxu0 %v2255
    %2492 = vmatprep.subr.bf16.mxu0 %v2254
    %2493 = vmatpush2.bf16.msra.mxu0 %v2253
    %2494 = vmatprep.subr.bf16.mxu0 %v2252
    %2495 = vmatpush2.bf16.msra.mxu0 %v2251
    %2496 = vmatprep.subr.bf16.mxu0 %v2250
    %2497 = vmatpush2.bf16.msra.mxu0 %v2249
    %2498 = vmatprep.mubr.bf16.mxu0 %v1737
    %2499 = vmatmul.mubr.bf16.gmra.mxu0 %v1736
    %v2500 = vpop.f32.mrf.mxu0
    %v2501 = vadd.f32 %v2460, %v2500
    %v2502 = vpop.f32.mrf.mxu0
    %v2503 = vadd.f32 %v2462, %v2502
    %v2504 = vpop.f32.mrf.mxu0
    %v2505 = vpop.f32.mrf.mxu0
    %2506 = vdwg.mxu0
    %2507 = vmatprep.subr.bf16.mxu0 %v2280
    %2508 = vmatpush1.bf16.msra.mxu0 %v2279
    %2509 = vmatprep.subr.bf16.mxu0 %v2278
    %2510 = vmatpush1.bf16.msra.mxu0 %v2277
    %2511 = vmatprep.subr.bf16.mxu0 %v2276
    %2512 = vmatpush1.bf16.msra.mxu0 %v2275
    %2513 = vmatprep.subr.bf16.mxu0 %v2274
    %2514 = vmatpush1.bf16.msra.mxu0 %v2273
    %2515 = vmatprep.subr.bf16.mxu0 %v2272
    %2516 = vmatpush1.bf16.msra.mxu0 %v2271
    %2517 = vmatprep.subr.bf16.mxu0 %v2270
    %2518 = vmatpush1.bf16.msra.mxu0 %v2269
    %2519 = vmatprep.subr.bf16.mxu0 %v2268
    %2520 = vmatpush1.bf16.msra.mxu0 %v2267
    %2521 = vmatprep.subr.bf16.mxu0 %v2266
    %2522 = vmatpush1.bf16.msra.mxu0 %v2265
    %2523 = vmatprep.subr.bf16.mxu0 %v2296
    %2524 = vmatpush2.bf16.msra.mxu0 %v2295
    %2525 = vmatprep.subr.bf16.mxu0 %v2294
    %2526 = vmatpush2.bf16.msra.mxu0 %v2293
    %2527 = vmatprep.subr.bf16.mxu0 %v2292
    %2528 = vmatpush2.bf16.msra.mxu0 %v2291
    %2529 = vmatprep.subr.bf16.mxu0 %v2290
    %2530 = vmatpush2.bf16.msra.mxu0 %v2289
    %2531 = vmatprep.subr.bf16.mxu0 %v2288
    %2532 = vmatpush2.bf16.msra.mxu0 %v2287
    %2533 = vmatprep.subr.bf16.mxu0 %v2286
    %2534 = vmatpush2.bf16.msra.mxu0 %v2285
    %2535 = vmatprep.subr.bf16.mxu0 %v2284
    %2536 = vmatpush2.bf16.msra.mxu0 %v2283
    %2537 = vmatprep.subr.bf16.mxu0 %v2282
    %2538 = vmatpush2.bf16.msra.mxu0 %v2281
    %2539 = vmatprep.mubr.bf16.mxu0 %v1739
    %2540 = vmatmul.mubr.bf16.gmra.mxu0 %v1738
    %v2541 = vpop.f32.mrf.mxu0
    %v2542 = vadd.f32 %v2501, %v2541
    %v2543 = vpop.f32.mrf.mxu0
    %v2544 = vadd.f32 %v2503, %v2543
    %v2545 = vpop.f32.mrf.mxu0
    %v2546 = vpop.f32.mrf.mxu0
    %2547 = vdwg.mxu0
    %2548 = vmatprep.subr.bf16.mxu0 %v2312
    %2549 = vmatpush1.bf16.msra.mxu0 %v2311
    %2550 = vmatprep.subr.bf16.mxu0 %v2310
    %2551 = vmatpush1.bf16.msra.mxu0 %v2309
    %2552 = vmatprep.subr.bf16.mxu0 %v2308
    %2553 = vmatpush1.bf16.msra.mxu0 %v2307
    %2554 = vmatprep.subr.bf16.mxu0 %v2306
    %2555 = vmatpush1.bf16.msra.mxu0 %v2305
    %2556 = vmatprep.subr.bf16.mxu0 %v2304
    %2557 = vmatpush1.bf16.msra.mxu0 %v2303
    %2558 = vmatprep.subr.bf16.mxu0 %v2302
    %2559 = vmatpush1.bf16.msra.mxu0 %v2301
    %2560 = vmatprep.subr.bf16.mxu0 %v2300
    %2561 = vmatpush1.bf16.msra.mxu0 %v2299
    %2562 = vmatprep.subr.bf16.mxu0 %v2298
    %2563 = vmatpush1.bf16.msra.mxu0 %v2297
    %2564 = vmatprep.subr.bf16.mxu0 0
    %2565 = vmatpush2.bf16.msra.mxu0 0
    %2566 = vmatprep.subr.bf16.mxu0 0
    %2567 = vmatpush2.bf16.msra.mxu0 0
    %2568 = vmatprep.subr.bf16.mxu0 0
    %2569 = vmatpush2.bf16.msra.mxu0 0
    %2570 = vmatprep.subr.bf16.mxu0 0
    %2571 = vmatpush2.bf16.msra.mxu0 0
    %2572 = vmatprep.subr.bf16.mxu0 0
    %2573 = vmatpush2.bf16.msra.mxu0 0
    %2574 = vmatprep.subr.bf16.mxu0 0
    %2575 = vmatpush2.bf16.msra.mxu0 0
    %2576 = vmatprep.subr.bf16.mxu0 0
    %2577 = vmatpush2.bf16.msra.mxu0 0
    %2578 = vmatprep.subr.bf16.mxu0 0
    %2579 = vmatpush2.bf16.msra.mxu0 0
    %2580 = vmatprep.mubr.bf16.mxu0 0
    %2581 = vmatmul.mubr.bf16.gmra.mxu0 %v1740
    %v2582 = vpop.f32.mrf.mxu0
    %v2583 = vadd.f32 %v2542, %v2582
    %v2584 = vpop.f32.mrf.mxu0
    %v2585 = vadd.f32 %v2544, %v2584
    %v2586 = vpop.f32.mrf.mxu0
    %v2587 = vpop.f32.mrf.mxu0
    %2588 = vdwg.mxu0
    %2589 = vst [vmem:[%s14] sm:$0xff] %v1130
    %2590 = vst [vmem:[%s15] sm:$0xff] %v2583
    %2591 = vst [vmem:[%s15 + $0x8] sm:$0xff] %v2585
    // Predicated region
    $region74: #{vae_forward.1} parent=1 // pred_check
      _
    $region75: #{vae_forward.1} parent=1 // pred_check_branch
      %2593 = sbr.rel (0) target = $region77
    $region76: #{vae_forward.1} parent=1 // pred_region
      _
    $region77: #{vae_forward.1} parent=1 // pred_fallthru
      _
    // Predicated region
    $region78: #{vae_forward.1} parent=1 // pred_check
      _
    $region79: #{vae_forward.1} parent=1 // pred_check_branch
      %2595 = sbr.rel (0) target = $region81
    $region80: #{vae_forward.1} parent=1 // pred_region
      _
    $region81: #{vae_forward.1} parent=1 // pred_fallthru
      _
    // Predicated region
    $region82: #{vae_forward.1} parent=1 // pred_check
      _
    $region83: #{vae_forward.1} parent=1 // pred_check_branch
      %2597 = sbr.rel (0) target = $region85
    $region84: #{vae_forward.1} parent=1 // pred_region
      _
    $region85: #{vae_forward.1} parent=1 // pred_fallthru
      _
    // Predicated region
    $region86: #{vae_forward.1} parent=1 // pred_check
      _
    $region87: #{vae_forward.1} parent=1 // pred_check_branch
      %2599 = sbr.rel (0) target = $region89
    $region88: #{vae_forward.1} parent=1 // pred_region
      _
    $region89: #{vae_forward.1} parent=1 // pred_fallthru
      _
    %2600 = vsyncpa [#allocation3], 1
    %2601 = vsyncpa [#allocation5], 1
    %2602 = vsyncpa [#allocation8], 1

</llo_original>
